<compile_context>
chip_gen: v7x
topology: tpu7x:2x2x1
jax: 0.10.0
libtpu: 0.0.40
codegen_flags: <defaults>
</compile_context>

<pallas_src>
import functools

import jax
import jax.numpy as jnp
from jax.experimental import pallas as pl
from jax.experimental.pallas import tpu as pltpu


# ------------------------------------------------------------------
# Tiling / VMEM budgeting helpers
# ------------------------------------------------------------------
_LANE = 128
_TM_CANDIDATES = (2048, 1024, 512, 256, 128)
# Conservative across generations: v5e/v6e have 128 MiB VMEM per core, v7x has
# only 64 MiB physical, so never request more than 40 MiB scoped.
_VMEM_BUDGET = 40 * 1024 * 1024


def _round_up(x, m):
    return (x + m - 1) // m * m


@functools.lru_cache(maxsize=None)
def _tensorcores_per_chip():
    """Best-effort: v7x exposes 2 TensorCores per chip, earlier gens 1."""
    try:
        kind = jax.devices()[0].device_kind.lower()
    except Exception:  # pragma: no cover - defensive
        return 1
    return 2 if "v7" in kind else 1


def _vmem_estimate(co, tk, tm, has_res):
    """Rough VMEM bytes: double-buffered operands + f32 accumulator scratch."""
    b = 2 * co * tk * 2          # bT weights   (bf16, x2 pipeline buffers)
    b += 2 * tk * tm * 2         # aT im2col    (bf16, x2)
    b += 2 * co * 4              # bias         (f32,  x2)
    b += 2 * co * tm * 2         # output tile  (bf16, x2)
    if has_res:
        b += 2 * co * tm * 2     # residual     (bf16, x2)
    b += co * tm * 4             # accumulator scratch (f32, single)
    return b


def _choose_tk(k_dim):
    """Stream K in chunks only when it is large and 128-aligned (keeps every
    block either lane-aligned or a full-dim block)."""
    if k_dim >= 1024 and k_dim % _LANE == 0:
        for t in (1024, 512, 256, 128):
            if k_dim % t == 0:
                return t
    return k_dim


def _choose_tm(mp, co, tk, has_res):
    """Largest M tile that divides Mp and fits the VMEM budget; on 2-TC chips
    prefer >=2 tiles so the 'parallel' axis can be split across cores."""
    fit = [t for t in _TM_CANDIDATES
           if mp % t == 0 and _vmem_estimate(co, tk, t, has_res) <= int(0.7 * _VMEM_BUDGET)]
    if not fit:
        return _LANE
    multi = [t for t in fit if mp // t >= 2]
    if _tensorcores_per_chip() >= 2 and multi:
        return multi[0]
    return fit[0]


# ------------------------------------------------------------------
# Pallas kernels: fused GEMM + bias + PReLU (+ optional +/- residual)
# ------------------------------------------------------------------
def _apply_bias_prelu(acc, bias_ref, alpha_ref):
    acc = acc + bias_ref[...]                       # (Co, 1) f32 broadcast
    alpha = alpha_ref[0]                            # scalar PReLU slope (SMEM)
    return jnp.where(acc >= 0.0, acc, alpha * acc)  # f32 epilogue math


def _gemm_prelu_kernel(bT_ref, aT_ref, bias_ref, alpha_ref, o_ref, acc_ref):
    kk = pl.program_id(1)

    @pl.when(kk == 0)
    def _():
        acc_ref[...] = jnp.zeros_like(acc_ref)

    acc_ref[...] += jnp.dot(bT_ref[...], aT_ref[...],
                            preferred_element_type=jnp.float32)

    @pl.when(kk == pl.num_programs(1) - 1)
    def _():
        o_ref[...] = _apply_bias_prelu(acc_ref[...], bias_ref,
                                       alpha_ref).astype(o_ref.dtype)


def _gemm_prelu_res_kernel(bT_ref, aT_ref, bias_ref, alpha_ref, res_ref,
                           o_ref, acc_ref, *, subtract):
    kk = pl.program_id(1)

    @pl.when(kk == 0)
    def _():
        acc_ref[...] = jnp.zeros_like(acc_ref)

    acc_ref[...] += jnp.dot(bT_ref[...], aT_ref[...],
                            preferred_element_type=jnp.float32)

    @pl.when(kk == pl.num_programs(1) - 1)
    def _():
        act = _apply_bias_prelu(acc_ref[...], bias_ref, alpha_ref)
        res = res_ref[...].astype(jnp.float32)
        out = act - res if subtract else act + res   # sign baked in at trace time
        o_ref[...] = out.astype(o_ref.dtype)


def fused_gemm_prelu(bT, aT, bias, alpha, residual=None, subtract=False):
    """out = PReLU(bT @ aT + bias) [+/- residual], stored bf16.

    bT: (Co, K) bf16   aT: (K, M) bf16   bias: (Co, 1) f32
    alpha: (1,) f32    residual: (Co, M) bf16 or None
    Returns (Co, M) bf16.  M is lane-dense; tiles along M run as a parallel
    grid, K streams as an 'arbitrary' (accumulating) grid axis.
    """
    Co, K = bT.shape
    Kb, M = aT.shape
    assert Kb == K, (Kb, K)

    # Defensive dtype guards (no-ops: everything already arrives in the right
    # dtype; activations were cast to bf16 once, at the un-expanded source).
    if bT.dtype != jnp.bfloat16:
        bT = bT.astype(jnp.bfloat16)
    if aT.dtype != jnp.bfloat16:
        aT = aT.astype(jnp.bfloat16)
    if bias.dtype != jnp.float32:
        bias = bias.astype(jnp.float32)
    if alpha.dtype != jnp.float32:
        alpha = alpha.astype(jnp.float32)
    if residual is not None and residual.dtype != jnp.bfloat16:
        residual = residual.astype(jnp.bfloat16)

    Mp = _round_up(M, _LANE)
    if Mp != M:
        # Rarely taken for SR workloads (M is usually 128-aligned already).
        # TODO(synk): pad the batch dim at the source so this pass never runs.
        aT = jnp.pad(aT, ((0, 0), (0, Mp - M)))
        if residual is not None:
            residual = jnp.pad(residual, ((0, 0), (0, Mp - M)))

    has_res = residual is not None
    TK = _choose_tk(K)
    TM = _choose_tm(Mp, Co, TK, has_res)
    m_tiles, k_tiles = Mp // TM, K // TK

    in_specs = [
        pl.BlockSpec((Co, TK), lambda i, kk: (0, kk)),        # weights
        pl.BlockSpec((TK, TM), lambda i, kk: (kk, i)),        # activations
        pl.BlockSpec((Co, 1), lambda i, kk: (0, 0)),          # bias
        pl.BlockSpec(memory_space=pltpu.MemorySpace.SMEM),    # PReLU slope
    ]
    args = [bT, aT, bias, alpha]
    if has_res:
        in_specs.append(pl.BlockSpec((Co, TM), lambda i, kk: (0, i)))
        args.append(residual)
        kernel = functools.partial(_gemm_prelu_res_kernel, subtract=subtract)
    else:
        kernel = _gemm_prelu_kernel

    est = _vmem_estimate(Co, TK, TM, has_res)
    vmem_limit = int(min(max(2 * est, 16 * 1024 * 1024), _VMEM_BUDGET))

    out = pl.pallas_call(
        kernel,
        out_shape=jax.ShapeDtypeStruct((Co, Mp), jnp.bfloat16),
        grid=(m_tiles, k_tiles),
        in_specs=in_specs,
        out_specs=pl.BlockSpec((Co, TM), lambda i, kk: (0, i)),
        scratch_shapes=[pltpu.VMEM((Co, TM), jnp.float32)],
        compiler_params=pltpu.CompilerParams(
            dimension_semantics=("parallel", "arbitrary"),
            vmem_limit_bytes=vmem_limit),
    )(*args)
    return out[:, :M] if Mp != M else out


# ------------------------------------------------------------------
# im2col / phase-shuffle glue (plain JAX; the GEMM is the hot Pallas path)
# ------------------------------------------------------------------
def _im2col_T(x, kh, kw, stride, padding):
    """x: (Cin, N, H, W) -> A_T: (kh*kw*Cin, N*Ho*Wo); row order (kh, kw, cin)."""
    Cin, N, H, W = x.shape
    xp = jnp.pad(x, ((0, 0), (0, 0), (padding, padding), (padding, padding)))
    Ho = (H + 2 * padding - kh) // stride + 1
    Wo = (W + 2 * padding - kw) // stride + 1
    rows = []
    for ih in range(kh):
        for iw in range(kw):
            sl = xp[:, :, ih:ih + stride * (Ho - 1) + 1:stride,
                    iw:iw + stride * (Wo - 1) + 1:stride]
            rows.append(sl.reshape(Cin, N * Ho * Wo))
    return jnp.concatenate(rows, axis=0), (N, Ho, Wo)


def _to_phases(t, s):
    """(C, N, H*s, W*s) -> (s*s*C, N*H*W), rows ordered (rh, rw, c)."""
    C, N, Hs, Ws = t.shape
    H, W = Hs // s, Ws // s
    t = t.reshape(C, N, H, s, W, s)
    t = jnp.transpose(t, (3, 5, 0, 1, 2, 4))
    return t.reshape(s * s * C, N * H * W)


def _from_phases(o, s, C, N, H, W):
    """(s*s*C, N*H*W) -> (C, N, H*s, W*s)."""
    o = o.reshape(s, s, C, N, H, W)
    o = jnp.transpose(o, (2, 3, 4, 0, 5, 1))
    return o.reshape(C, N, H * s, W * s)


# ------------------------------------------------------------------
# Conv / Deconv blocks (norm=None, act='prelu', mode='CNA')
# ------------------------------------------------------------------
def conv_apply(p, x, k, stride, padding, residual=None, subtract=False):
    """PReLU(Conv2d(x) + b) [+/- residual]; x, residual: (C, N, H, W) bf16."""
    AT, (N, Ho, Wo) = _im2col_T(x, k, k, stride, padding)
    Cout = p["bias"].shape[0]
    M = N * Ho * Wo
    resT = None if residual is None else residual.reshape(Cout, M)
    out = fused_gemm_prelu(p["bT"], AT, p["bias"], p["alpha"], resT, subtract)
    return out.reshape(Cout, N, Ho, Wo)


def deconv_apply(p, x, k, stride, padding, residual=None, subtract=False):
    """PReLU(ConvTranspose2d(x) + b) [+/- residual] via phase decomposition."""
    Cin, N, H, W = x.shape
    s = stride
    L = k // s                       # per-phase sub-kernel size
    a = padding // s                 # per-phase input offset
    xp = jnp.pad(x, ((0, 0), (0, 0), (L - 1 - a, a), (L - 1 - a, a)))
    rows = []
    for dh in range(L):
        for dw in range(L):
            rows.append(xp[:, :, dh:dh + H, dw:dw + W].reshape(Cin, N * H * W))
    AT = jnp.concatenate(rows, axis=0)                  # (L*L*Cin, N*H*W)
    ss_cout = p["bias"].shape[0]
    Cout = ss_cout // (s * s)
    resT = None if residual is None else _to_phases(residual, s)
    out = fused_gemm_prelu(p["bT"], AT, p["bias"], p["alpha"], resT, subtract)
    return _from_phases(out, s, Cout, N, H, W)


def upproj_block(p, x, k, stride, padding):
    h0 = deconv_apply(p["deconv_1"], x, k, stride, padding)
    # L0 - x fused into conv_1 epilogue
    l0m = conv_apply(p["conv_1"], h0, k, stride, padding,
                     residual=x, subtract=True)
    # H1 + H0 fused into deconv_2 epilogue
    return deconv_apply(p["deconv_2"], l0m, k, stride, padding, residual=h0)


def downproj_block(p, x, k, stride, padding):
    l0 = conv_apply(p["conv_1"], x, k, stride, padding)
    # H0 - x fused into deconv_1 epilogue
    h0m = deconv_apply(p["deconv_1"], l0, k, stride, padding,
                       residual=x, subtract=True)
    # L1 + L0 fused into conv_2 epilogue
    return conv_apply(p["conv_2"], h0m, k, stride, padding, residual=l0)


def densebackproj_forward(params, x_nchw, *, k, stride, padding, bp_stages):
    # NCHW -> (C, N, H, W); single bf16 cast on the un-expanded input.
    x = jnp.transpose(x_nchw, (1, 0, 2, 3)).astype(jnp.bfloat16)
    low_features, high_features = [], []
    h = upproj_block(params["upproj"][0], x, k, stride, padding)
    high_features.append(h)
    for index in range(bp_stages - 1):
        if index < 1:
            l = downproj_block(params["downproj"][index], h, k, stride, padding)
            low_features.append(l)
            h = upproj_block(params["upproj"][index + 1], l, k, stride, padding)
            high_features.append(h)
        else:
            h_concat = jnp.concatenate(high_features, axis=0)
            dp = params["downproj"][index]
            l = downproj_block(dp["down"],
                               conv_apply(dp["dc"], h_concat, 1, 1, 0),
                               k, stride, padding)
            low_features.append(l)
            l_concat = jnp.concatenate(low_features, axis=0)
            up = params["upproj"][index + 1]
            h = upproj_block(up["up"],
                             conv_apply(up["uc"], l_concat, 1, 1, 0),
                             k, stride, padding)
            high_features.append(h)
    out = jnp.concatenate(high_features, axis=0)        # (C_total, N, H, W)
    # Back to NCHW; return f32 to keep the module's external dtype contract.
    return jnp.transpose(out, (1, 0, 2, 3)).astype(jnp.float32)


# ------------------------------------------------------------------
# Parameter init: precompute GEMM-ready (bf16) weights once
# ------------------------------------------------------------------
_PRELU_SLOPE = 0.2   # activation() default slope (PReLU num_parameters=1)


def _init_conv(key, cin, cout, k):
    kw_, kb_ = jax.random.split(key)
    w = jax.random.normal(kw_, (cout, cin, k, k), jnp.float32) * 0.05
    b = jax.random.normal(kb_, (cout,), jnp.float32) * 0.05
    bT = jnp.transpose(w, (0, 2, 3, 1)).reshape(cout, k * k * cin)
    return {"bT": bT.astype(jnp.bfloat16),
            "bias": b.reshape(cout, 1),
            "alpha": jnp.full((1,), _PRELU_SLOPE, jnp.float32)}


def _deconv_phase_weight(w, stride, padding):
    """w: (Cin, Cout, KH, KW) torch ConvTranspose2d layout -> (s*s*Cout, L*L*Cin)."""
    Cin, Cout, KH, KW = w.shape
    s, L = stride, KH // stride
    b = (jnp.arange(s) + padding) % s                    # per-phase tap offset
    d = jnp.arange(L)
    k_idx = s * (L - 1 - d)[None, :] + b[:, None]        # (s, L) kernel indices
    wt = w[:, :, k_idx, :]                               # (Cin, Cout, s, L, KW)
    wt = wt[:, :, :, :, k_idx]                           # (Cin, Cout, s, L, s, L)
    T = jnp.transpose(wt, (2, 4, 1, 3, 5, 0))            # (rh, rw, Cout, dh, dw, Cin)
    return T.reshape(s * s * Cout, L * L * Cin)


def _init_deconv(key, cin, cout, k, stride, padding):
    assert k % stride == 0 and padding % stride == 0 and k - 2 * padding == stride, \
        "phase-decomposed deconv fast path requires SRFBN-style (k, s, p)"
    kw_, kb_ = jax.random.split(key)
    w = jax.random.normal(kw_, (cin, cout, k, k), jnp.float32) * 0.05
    b = jax.random.normal(kb_, (cout,), jnp.float32) * 0.05
    return {"bT": _deconv_phase_weight(w, stride, padding).astype(jnp.bfloat16),
            "bias": jnp.tile(b, stride * stride).reshape(stride * stride * cout, 1),
            "alpha": jnp.full((1,), _PRELU_SLOPE, jnp.float32)}


def _init_upproj(key, cin, cout, k, stride, padding):
    k1, k2, k3 = jax.random.split(key, 3)
    return {"deconv_1": _init_deconv(k1, cin, cout, k, stride, padding),
            "conv_1": _init_conv(k2, cout, cout, k),
            "deconv_2": _init_deconv(k3, cout, cout, k, stride, padding)}


def _init_downproj(key, cin, cout, k, stride, padding):
    k1, k2, k3 = jax.random.split(key, 3)
    return {"conv_1": _init_conv(k1, cin, cout, k),
            "deconv_1": _init_deconv(k2, cout, cout, k, stride, padding),
            "conv_2": _init_conv(k3, cout, cout, k)}


def init_densebackproj(key, in_channel, out_channel, kernel_size, bp_stages,
                       stride, padding):
    keys = jax.random.split(key, 4 * bp_stages + 4)
    ki = iter(range(len(keys)))
    params = {"upproj": [], "downproj": []}
    params["upproj"].append(
        _init_upproj(keys[next(ki)], in_channel, out_channel, kernel_size,
                     stride, padding))
    for index in range(bp_stages - 1):
        if index < 1:
            params["upproj"].append(
                _init_upproj(keys[next(ki)], out_channel, out_channel,
                             kernel_size, stride, padding))
            params["downproj"].append(
                _init_downproj(keys[next(ki)], out_channel, out_channel,
                               kernel_size, stride, padding))
        else:
            params["upproj"].append({
                "uc": _init_conv(keys[next(ki)], out_channel * (index + 1),
                                 out_channel, 1),
                "up": _init_upproj(keys[next(ki)], out_channel, out_channel,
                                   kernel_size, stride, padding)})
            params["downproj"].append({
                "dc": _init_conv(keys[next(ki)], out_channel * (index + 1),
                                 out_channel, 1),
                "down": _init_downproj(keys[next(ki)], out_channel, out_channel,
                                       kernel_size, stride, padding)})
    return params


# ------------------------------------------------------------------
if __name__ == "__main__":
    key = jax.random.PRNGKey(0)
    pkey, xkey = jax.random.split(key)

    # SRFBN x2 back-projection config: kernel=6, stride=2, padding=2.
    # The module's residual arithmetic (L0 - x, H0 - x) requires
    # in_channel == out_channel, so the test uses matching channel counts.
    IN_C = OUT_C = 8
    KSIZE, STAGES = 6, 3
    STRIDE, PADDING = 2, 2
    BATCH, HLOW = 2, 8                       # low-res 8x8 -> high-res 16x16

    params = init_densebackproj(pkey, IN_C, OUT_C, KSIZE, STAGES,
                                STRIDE, PADDING)
    x = jax.random.normal(xkey, (BATCH, IN_C, HLOW, HLOW), jnp.float32)  # NCHW

    fwd = jax.jit(functools.partial(
        densebackproj_forward, k=KSIZE, stride=STRIDE, padding=PADDING,
        bp_stages=STAGES))
    out = fwd(params, x)
    jax.block_until_ready(out)

    expected = (BATCH, OUT_C * STAGES, HLOW * STRIDE, HLOW * STRIDE)  # (2,24,16,16)
    assert out.shape == expected, (out.shape, expected)
    assert out.dtype == jnp.float32
    assert bool(jnp.all(jnp.isfinite(out)))
    print("KERNEL_OK")
</pallas_src>

<mosaic_0001>
module attributes {stable_mosaic.version = 11 : i64} {
  func.func @_gemm_prelu_kernel(%arg0: i32, %arg1: i32, %arg2: memref<32x72xbf16, #tpu.memory_space<vmem>>, %arg3: memref<72x128xbf16, #tpu.memory_space<vmem>>, %arg4: memref<32x1xf32, #tpu.memory_space<vmem>>, %arg5: memref<1xf32, #tpu.memory_space<smem>>, %arg6: memref<32x128xbf16, #tpu.memory_space<vmem>>, %arg7: memref<32x128xf32, #tpu.memory_space<vmem>>) attributes {dimension_semantics = [#tpu.dimension_semantics<parallel>, #tpu.dimension_semantics<arbitrary>], iteration_bounds = array<i64: 1, 1>, scalar_prefetch = 0 : i64, scratch_operands = 1 : i64, tpu.core_type = #tpu.core_type<tc>, window_params = [{transform_indices = @transform_0, window_bounds = array<i64: 32, 72>}, {transform_indices = @transform_1, window_bounds = array<i64: 72, 128>}, {pipeline_mode = #tpu.pipeline_mode<synchronous>, transform_indices = @transform_2, window_bounds = array<i64: 32, 1>}, {transform_indices = @transform_3, window_bounds = array<i64: 1>}, {transform_indices = @transform_4, window_bounds = array<i64: 32, 128>}]} {
    %c0_i32 = arith.constant 0 : i32
    %0 = arith.cmpi eq, %arg1, %c0_i32 : i32
    %1 = arith.extui %0 : i1 to i32
    %c0_i32_0 = arith.constant 0 : i32
    %2 = arith.cmpi ne, %1, %c0_i32_0 : i32
    scf.if %2 {
      %cst_10 = arith.constant 0.000000e+00 : f32
      %12 = vector.broadcast %cst_10 : f32 to vector<32x128xf32>
      %c0_11 = arith.constant 0 : index
      %c0_12 = arith.constant 0 : index
      %13 = vector.load %arg7[%c0_11, %c0_12] : memref<32x128xf32, #tpu.memory_space<vmem>>, vector<32x128xf32>
      tpu.vector_store %arg7[%c0_11, %c0_12], %12 {strides = array<i32>} : memref<32x128xf32, #tpu.memory_space<vmem>>, vector<32x128xf32>,
    } else {
    }
    %c0 = arith.constant 0 : index
    %c0_1 = arith.constant 0 : index
    %3 = vector.load %arg7[%c0, %c0_1] : memref<32x128xf32, #tpu.memory_space<vmem>>, vector<32x128xf32>
    %c0_2 = arith.constant 0 : index
    %c0_3 = arith.constant 0 : index
    %4 = vector.load %arg2[%c0_2, %c0_3] : memref<32x72xbf16, #tpu.memory_space<vmem>>, vector<32x72xbf16>
    %c0_4 = arith.constant 0 : index
    %c0_5 = arith.constant 0 : index
    %5 = vector.load %arg3[%c0_4, %c0_5] : memref<72x128xbf16, #tpu.memory_space<vmem>>, vector<72x128xbf16>
    %cst = arith.constant dense<0.000000e+00> : vector<32x128xf32>
    %6 = tpu.matmul %4, %5, %cst {dimension_numbers = #tpu.dot_dimension_numbers<[1], [0], [0], [1], [0, 0, 1, 1], [], []>} : vector<32x72xbf16>, vector<72x128xbf16>, vector<32x128xf32> -> vector<32x128xf32>
    %7 = arith.addf %3, %6 : vector<32x128xf32>
    %c0_6 = arith.constant 0 : index
    %c0_7 = arith.constant 0 : index
    %8 = vector.load %arg7[%c0_6, %c0_7] : memref<32x128xf32, #tpu.memory_space<vmem>>, vector<32x128xf32>
    tpu.vector_store %arg7[%c0_6, %c0_7], %7 {strides = array<i32>} : memref<32x128xf32, #tpu.memory_space<vmem>>, vector<32x128xf32>,
    %c0_i32_8 = arith.constant 0 : i32
    %9 = arith.cmpi eq, %arg1, %c0_i32_8 : i32
    %10 = arith.extui %9 : i1 to i32
    %c0_i32_9 = arith.constant 0 : i32
    %11 = arith.cmpi ne, %10, %c0_i32_9 : i32
    scf.if %11 {
      %c0_10 = arith.constant 0 : index
      %c0_11 = arith.constant 0 : index
      %12 = vector.load %arg7[%c0_10, %c0_11] : memref<32x128xf32, #tpu.memory_space<vmem>>, vector<32x128xf32>
      %c0_12 = arith.constant 0 : index
      %c0_13 = arith.constant 0 : index
      %13 = vector.load %arg4[%c0_12, %c0_13] : memref<32x1xf32, #tpu.memory_space<vmem>>, vector<32x1xf32>
      %14 = vector.broadcast %13 : vector<32x1xf32> to vector<32x128xf32>
      %15 = arith.addf %12, %14 : vector<32x128xf32>
      %c0_14 = arith.constant 0 : index
      %16 = memref.load %arg5[%c0_14] : memref<1xf32, #tpu.memory_space<smem>>
      %cst_15 = arith.constant 0.000000e+00 : f32
      %17 = vector.broadcast %cst_15 : f32 to vector<32x128xf32>
      %18 = arith.cmpf oge, %15, %17 : vector<32x128xf32>
      %19 = vector.broadcast %16 : f32 to vector<32x128xf32>
      %20 = arith.mulf %19, %15 : vector<32x128xf32>
      %21 = arith.select %18, %15, %20 : vector<32x128xi1>, vector<32x128xf32>
      %22 = arith.truncf %21 : vector<32x128xf32> to vector<32x128xbf16>
      %c0_16 = arith.constant 0 : index
      %c0_17 = arith.constant 0 : index
      %23 = vector.load %arg6[%c0_16, %c0_17] : memref<32x128xbf16, #tpu.memory_space<vmem>>, vector<32x128xbf16>
      tpu.vector_store %arg6[%c0_16, %c0_17], %22 {strides = array<i32>} : memref<32x128xbf16, #tpu.memory_space<vmem>>, vector<32x128xbf16>,
    } else {
    }
    return
  }
  func.func @transform_0(%arg0: i32, %arg1: i32) -> (i32, i32) {
    %c0_i32 = arith.constant 0 : i32
    %c0_i32_0 = arith.constant 0 : i32
    return %c0_i32, %arg1 : i32, i32
  }
  func.func @transform_1(%arg0: i32, %arg1: i32) -> (i32, i32) {
    %c0_i32 = arith.constant 0 : i32
    return %arg1, %arg0 : i32, i32
  }
  func.func @transform_2(%arg0: i32, %arg1: i32) -> (i32, i32) {
    %c0_i32 = arith.constant 0 : i32
    %c0_i32_0 = arith.constant 0 : i32
    %c0_i32_1 = arith.constant 0 : i32
    return %c0_i32, %c0_i32_0 : i32, i32
  }
  func.func @transform_3(%arg0: i32, %arg1: i32) -> i32 {
    %c0_i32 = arith.constant 0 : i32
    %c0_i32_0 = arith.constant 0 : i32
    return %c0_i32 : i32
  }
  func.func @transform_4(%arg0: i32, %arg1: i32) -> (i32, i32) {
    %c0_i32 = arith.constant 0 : i32
    %c0_i32_0 = arith.constant 0 : i32
    return %c0_i32, %arg0 : i32, i32
  }
}

module attributes {stable_mosaic.version = 11 : i64} {
  func.func @_gemm_prelu_res_kernel(%arg0: i32, %arg1: i32, %arg2: memref<8x288xbf16, #tpu.memory_space<vmem>>, %arg3: memref<288x128xbf16, #tpu.memory_space<vmem>>, %arg4: memref<8x1xf32, #tpu.memory_space<vmem>>, %arg5: memref<1xf32, #tpu.memory_space<smem>>, %arg6: memref<8x128xbf16, #tpu.memory_space<vmem>>, %arg7: memref<8x128xbf16, #tpu.memory_space<vmem>>, %arg8: memref<8x128xf32, #tpu.memory_space<vmem>>) attributes {dimension_semantics = [#tpu.dimension_semantics<parallel>, #tpu.dimension_semantics<arbitrary>], iteration_bounds = array<i64: 1, 1>, scalar_prefetch = 0 : i64, scratch_operands = 1 : i64, tpu.core_type = #tpu.core_type<tc>, window_params = [{transform_indices = @transform_0, window_bounds = array<i64: 8, 288>}, {transform_indices = @transform_1, window_bounds = array<i64: 288, 128>}, {pipeline_mode = #tpu.pipeline_mode<synchronous>, transform_indices = @transform_2, window_bounds = array<i64: 8, 1>}, {transform_indices = @transform_3, window_bounds = array<i64: 1>}, {transform_indices = @transform_4, window_bounds = array<i64: 8, 128>}, {transform_indices = @transform_5, window_bounds = array<i64: 8, 128>}]} {
    %c0_i32 = arith.constant 0 : i32
    %0 = arith.cmpi eq, %arg1, %c0_i32 : i32
    %1 = arith.extui %0 : i1 to i32
    %c0_i32_0 = arith.constant 0 : i32
    %2 = arith.cmpi ne, %1, %c0_i32_0 : i32
    scf.if %2 {
      %cst_10 = arith.constant 0.000000e+00 : f32
      %12 = vector.broadcast %cst_10 : f32 to vector<8x128xf32>
      %c0_11 = arith.constant 0 : index
      %c0_12 = arith.constant 0 : index
      %13 = vector.load %arg8[%c0_11, %c0_12] : memref<8x128xf32, #tpu.memory_space<vmem>>, vector<8x128xf32>
      tpu.vector_store %arg8[%c0_11, %c0_12], %12 {strides = array<i32>} : memref<8x128xf32, #tpu.memory_space<vmem>>, vector<8x128xf32>,
    } else {
    }
    %c0 = arith.constant 0 : index
    %c0_1 = arith.constant 0 : index
    %3 = vector.load %arg8[%c0, %c0_1] : memref<8x128xf32, #tpu.memory_space<vmem>>, vector<8x128xf32>
    %c0_2 = arith.constant 0 : index
    %c0_3 = arith.constant 0 : index
    %4 = vector.load %arg2[%c0_2, %c0_3] : memref<8x288xbf16, #tpu.memory_space<vmem>>, vector<8x288xbf16>
    %c0_4 = arith.constant 0 : index
    %c0_5 = arith.constant 0 : index
    %5 = vector.load %arg3[%c0_4, %c0_5] : memref<288x128xbf16, #tpu.memory_space<vmem>>, vector<288x128xbf16>
    %cst = arith.constant dense<0.000000e+00> : vector<8x128xf32>
    %6 = tpu.matmul %4, %5, %cst {dimension_numbers = #tpu.dot_dimension_numbers<[1], [0], [0], [1], [0, 0, 1, 1], [], []>} : vector<8x288xbf16>, vector<288x128xbf16>, vector<8x128xf32> -> vector<8x128xf32>
    %7 = arith.addf %3, %6 : vector<8x128xf32>
    %c0_6 = arith.constant 0 : index
    %c0_7 = arith.constant 0 : index
    %8 = vector.load %arg8[%c0_6, %c0_7] : memref<8x128xf32, #tpu.memory_space<vmem>>, vector<8x128xf32>
    tpu.vector_store %arg8[%c0_6, %c0_7], %7 {strides = array<i32>} : memref<8x128xf32, #tpu.memory_space<vmem>>, vector<8x128xf32>,
    %c0_i32_8 = arith.constant 0 : i32
    %9 = arith.cmpi eq, %arg1, %c0_i32_8 : i32
    %10 = arith.extui %9 : i1 to i32
    %c0_i32_9 = arith.constant 0 : i32
    %11 = arith.cmpi ne, %10, %c0_i32_9 : i32
    scf.if %11 {
      %c0_10 = arith.constant 0 : index
      %c0_11 = arith.constant 0 : index
      %12 = vector.load %arg8[%c0_10, %c0_11] : memref<8x128xf32, #tpu.memory_space<vmem>>, vector<8x128xf32>
      %c0_12 = arith.constant 0 : index
      %c0_13 = arith.constant 0 : index
      %13 = vector.load %arg4[%c0_12, %c0_13] : memref<8x1xf32, #tpu.memory_space<vmem>>, vector<8x1xf32>
      %14 = vector.broadcast %13 : vector<8x1xf32> to vector<8x128xf32>
      %15 = arith.addf %12, %14 : vector<8x128xf32>
      %c0_14 = arith.constant 0 : index
      %16 = memref.load %arg5[%c0_14] : memref<1xf32, #tpu.memory_space<smem>>
      %cst_15 = arith.constant 0.000000e+00 : f32
      %17 = vector.broadcast %cst_15 : f32 to vector<8x128xf32>
      %18 = arith.cmpf oge, %15, %17 : vector<8x128xf32>
      %19 = vector.broadcast %16 : f32 to vector<8x128xf32>
      %20 = arith.mulf %19, %15 : vector<8x128xf32>
      %21 = arith.select %18, %15, %20 : vector<8x128xi1>, vector<8x128xf32>
      %c0_16 = arith.constant 0 : index
      %c0_17 = arith.constant 0 : index
      %22 = vector.load %arg6[%c0_16, %c0_17] : memref<8x128xbf16, #tpu.memory_space<vmem>>, vector<8x128xbf16>
      %23 = arith.extf %22 : vector<8x128xbf16> to vector<8x128xf32>
      %24 = arith.subf %21, %23 : vector<8x128xf32>
      %25 = arith.truncf %24 : vector<8x128xf32> to vector<8x128xbf16>
      %c0_18 = arith.constant 0 : index
      %c0_19 = arith.constant 0 : index
      %26 = vector.load %arg7[%c0_18, %c0_19] : memref<8x128xbf16, #tpu.memory_space<vmem>>, vector<8x128xbf16>
      tpu.vector_store %arg7[%c0_18, %c0_19], %25 {strides = array<i32>} : memref<8x128xbf16, #tpu.memory_space<vmem>>, vector<8x128xbf16>,
    } else {
    }
    return
  }
  func.func @transform_0(%arg0: i32, %arg1: i32) -> (i32, i32) {
    %c0_i32 = arith.constant 0 : i32
    %c0_i32_0 = arith.constant 0 : i32
    return %c0_i32, %arg1 : i32, i32
  }
  func.func @transform_1(%arg0: i32, %arg1: i32) -> (i32, i32) {
    %c0_i32 = arith.constant 0 : i32
    return %arg1, %arg0 : i32, i32
  }
  func.func @transform_2(%arg0: i32, %arg1: i32) -> (i32, i32) {
    %c0_i32 = arith.constant 0 : i32
    %c0_i32_0 = arith.constant 0 : i32
    %c0_i32_1 = arith.constant 0 : i32
    return %c0_i32, %c0_i32_0 : i32, i32
  }
  func.func @transform_3(%arg0: i32, %arg1: i32) -> i32 {
    %c0_i32 = arith.constant 0 : i32
    %c0_i32_0 = arith.constant 0 : i32
    return %c0_i32 : i32
  }
  func.func @transform_4(%arg0: i32, %arg1: i32) -> (i32, i32) {
    %c0_i32 = arith.constant 0 : i32
    %c0_i32_0 = arith.constant 0 : i32
    return %c0_i32, %arg0 : i32, i32
  }
  func.func @transform_5(%arg0: i32, %arg1: i32) -> (i32, i32) {
    %c0_i32 = arith.constant 0 : i32
    %c0_i32_0 = arith.constant 0 : i32
    return %c0_i32, %arg0 : i32, i32
  }
}

module attributes {stable_mosaic.version = 11 : i64} {
  func.func @_gemm_prelu_res_kernel(%arg0: i32, %arg1: i32, %arg2: memref<32x72xbf16, #tpu.memory_space<vmem>>, %arg3: memref<72x128xbf16, #tpu.memory_space<vmem>>, %arg4: memref<32x1xf32, #tpu.memory_space<vmem>>, %arg5: memref<1xf32, #tpu.memory_space<smem>>, %arg6: memref<32x128xbf16, #tpu.memory_space<vmem>>, %arg7: memref<32x128xbf16, #tpu.memory_space<vmem>>, %arg8: memref<32x128xf32, #tpu.memory_space<vmem>>) attributes {dimension_semantics = [#tpu.dimension_semantics<parallel>, #tpu.dimension_semantics<arbitrary>], iteration_bounds = array<i64: 1, 1>, scalar_prefetch = 0 : i64, scratch_operands = 1 : i64, tpu.core_type = #tpu.core_type<tc>, window_params = [{transform_indices = @transform_0, window_bounds = array<i64: 32, 72>}, {transform_indices = @transform_1, window_bounds = array<i64: 72, 128>}, {pipeline_mode = #tpu.pipeline_mode<synchronous>, transform_indices = @transform_2, window_bounds = array<i64: 32, 1>}, {transform_indices = @transform_3, window_bounds = array<i64: 1>}, {transform_indices = @transform_4, window_bounds = array<i64: 32, 128>}, {transform_indices = @transform_5, window_bounds = array<i64: 32, 128>}]} {
    %c0_i32 = arith.constant 0 : i32
    %0 = arith.cmpi eq, %arg1, %c0_i32 : i32
    %1 = arith.extui %0 : i1 to i32
    %c0_i32_0 = arith.constant 0 : i32
    %2 = arith.cmpi ne, %1, %c0_i32_0 : i32
    scf.if %2 {
      %cst_10 = arith.constant 0.000000e+00 : f32
      %12 = vector.broadcast %cst_10 : f32 to vector<32x128xf32>
      %c0_11 = arith.constant 0 : index
      %c0_12 = arith.constant 0 : index
      %13 = vector.load %arg8[%c0_11, %c0_12] : memref<32x128xf32, #tpu.memory_space<vmem>>, vector<32x128xf32>
      tpu.vector_store %arg8[%c0_11, %c0_12], %12 {strides = array<i32>} : memref<32x128xf32, #tpu.memory_space<vmem>>, vector<32x128xf32>,
    } else {
    }
    %c0 = arith.constant 0 : index
    %c0_1 = arith.constant 0 : index
    %3 = vector.load %arg8[%c0, %c0_1] : memref<32x128xf32, #tpu.memory_space<vmem>>, vector<32x128xf32>
    %c0_2 = arith.constant 0 : index
    %c0_3 = arith.constant 0 : index
    %4 = vector.load %arg2[%c0_2, %c0_3] : memref<32x72xbf16, #tpu.memory_space<vmem>>, vector<32x72xbf16>
    %c0_4 = arith.constant 0 : index
    %c0_5 = arith.constant 0 : index
    %5 = vector.load %arg3[%c0_4, %c0_5] : memref<72x128xbf16, #tpu.memory_space<vmem>>, vector<72x128xbf16>
    %cst = arith.constant dense<0.000000e+00> : vector<32x128xf32>
    %6 = tpu.matmul %4, %5, %cst {dimension_numbers = #tpu.dot_dimension_numbers<[1], [0], [0], [1], [0, 0, 1, 1], [], []>} : vector<32x72xbf16>, vector<72x128xbf16>, vector<32x128xf32> -> vector<32x128xf32>
    %7 = arith.addf %3, %6 : vector<32x128xf32>
    %c0_6 = arith.constant 0 : index
    %c0_7 = arith.constant 0 : index
    %8 = vector.load %arg8[%c0_6, %c0_7] : memref<32x128xf32, #tpu.memory_space<vmem>>, vector<32x128xf32>
    tpu.vector_store %arg8[%c0_6, %c0_7], %7 {strides = array<i32>} : memref<32x128xf32, #tpu.memory_space<vmem>>, vector<32x128xf32>,
    %c0_i32_8 = arith.constant 0 : i32
    %9 = arith.cmpi eq, %arg1, %c0_i32_8 : i32
    %10 = arith.extui %9 : i1 to i32
    %c0_i32_9 = arith.constant 0 : i32
    %11 = arith.cmpi ne, %10, %c0_i32_9 : i32
    scf.if %11 {
      %c0_10 = arith.constant 0 : index
      %c0_11 = arith.constant 0 : index
      %12 = vector.load %arg8[%c0_10, %c0_11] : memref<32x128xf32, #tpu.memory_space<vmem>>, vector<32x128xf32>
      %c0_12 = arith.constant 0 : index
      %c0_13 = arith.constant 0 : index
      %13 = vector.load %arg4[%c0_12, %c0_13] : memref<32x1xf32, #tpu.memory_space<vmem>>, vector<32x1xf32>
      %14 = vector.broadcast %13 : vector<32x1xf32> to vector<32x128xf32>
      %15 = arith.addf %12, %14 : vector<32x128xf32>
      %c0_14 = arith.constant 0 : index
      %16 = memref.load %arg5[%c0_14] : memref<1xf32, #tpu.memory_space<smem>>
      %cst_15 = arith.constant 0.000000e+00 : f32
      %17 = vector.broadcast %cst_15 : f32 to vector<32x128xf32>
      %18 = arith.cmpf oge, %15, %17 : vector<32x128xf32>
      %19 = vector.broadcast %16 : f32 to vector<32x128xf32>
      %20 = arith.mulf %19, %15 : vector<32x128xf32>
      %21 = arith.select %18, %15, %20 : vector<32x128xi1>, vector<32x128xf32>
      %c0_16 = arith.constant 0 : index
      %c0_17 = arith.constant 0 : index
      %22 = vector.load %arg6[%c0_16, %c0_17] : memref<32x128xbf16, #tpu.memory_space<vmem>>, vector<32x128xbf16>
      %23 = arith.extf %22 : vector<32x128xbf16> to vector<32x128xf32>
      %24 = arith.addf %21, %23 : vector<32x128xf32>
      %25 = arith.truncf %24 : vector<32x128xf32> to vector<32x128xbf16>
      %c0_18 = arith.constant 0 : index
      %c0_19 = arith.constant 0 : index
      %26 = vector.load %arg7[%c0_18, %c0_19] : memref<32x128xbf16, #tpu.memory_space<vmem>>, vector<32x128xbf16>
      tpu.vector_store %arg7[%c0_18, %c0_19], %25 {strides = array<i32>} : memref<32x128xbf16, #tpu.memory_space<vmem>>, vector<32x128xbf16>,
    } else {
    }
    return
  }
  func.func @transform_0(%arg0: i32, %arg1: i32) -> (i32, i32) {
    %c0_i32 = arith.constant 0 : i32
    %c0_i32_0 = arith.constant 0 : i32
    return %c0_i32, %arg1 : i32, i32
  }
  func.func @transform_1(%arg0: i32, %arg1: i32) -> (i32, i32) {
    %c0_i32 = arith.constant 0 : i32
    return %arg1, %arg0 : i32, i32
  }
  func.func @transform_2(%arg0: i32, %arg1: i32) -> (i32, i32) {
    %c0_i32 = arith.constant 0 : i32
    %c0_i32_0 = arith.constant 0 : i32
    %c0_i32_1 = arith.constant 0 : i32
    return %c0_i32, %c0_i32_0 : i32, i32
  }
  func.func @transform_3(%arg0: i32, %arg1: i32) -> i32 {
    %c0_i32 = arith.constant 0 : i32
    %c0_i32_0 = arith.constant 0 : i32
    return %c0_i32 : i32
  }
  func.func @transform_4(%arg0: i32, %arg1: i32) -> (i32, i32) {
    %c0_i32 = arith.constant 0 : i32
    %c0_i32_0 = arith.constant 0 : i32
    return %c0_i32, %arg0 : i32, i32
  }
  func.func @transform_5(%arg0: i32, %arg1: i32) -> (i32, i32) {
    %c0_i32 = arith.constant 0 : i32
    %c0_i32_0 = arith.constant 0 : i32
    return %c0_i32, %arg0 : i32, i32
  }
}

module attributes {stable_mosaic.version = 11 : i64} {
  func.func @_gemm_prelu_kernel(%arg0: i32, %arg1: i32, %arg2: memref<8x288xbf16, #tpu.memory_space<vmem>>, %arg3: memref<288x128xbf16, #tpu.memory_space<vmem>>, %arg4: memref<8x1xf32, #tpu.memory_space<vmem>>, %arg5: memref<1xf32, #tpu.memory_space<smem>>, %arg6: memref<8x128xbf16, #tpu.memory_space<vmem>>, %arg7: memref<8x128xf32, #tpu.memory_space<vmem>>) attributes {dimension_semantics = [#tpu.dimension_semantics<parallel>, #tpu.dimension_semantics<arbitrary>], iteration_bounds = array<i64: 1, 1>, scalar_prefetch = 0 : i64, scratch_operands = 1 : i64, tpu.core_type = #tpu.core_type<tc>, window_params = [{transform_indices = @transform_0, window_bounds = array<i64: 8, 288>}, {transform_indices = @transform_1, window_bounds = array<i64: 288, 128>}, {pipeline_mode = #tpu.pipeline_mode<synchronous>, transform_indices = @transform_2, window_bounds = array<i64: 8, 1>}, {transform_indices = @transform_3, window_bounds = array<i64: 1>}, {transform_indices = @transform_4, window_bounds = array<i64: 8, 128>}]} {
    %c0_i32 = arith.constant 0 : i32
    %0 = arith.cmpi eq, %arg1, %c0_i32 : i32
    %1 = arith.extui %0 : i1 to i32
    %c0_i32_0 = arith.constant 0 : i32
    %2 = arith.cmpi ne, %1, %c0_i32_0 : i32
    scf.if %2 {
      %cst_10 = arith.constant 0.000000e+00 : f32
      %12 = vector.broadcast %cst_10 : f32 to vector<8x128xf32>
      %c0_11 = arith.constant 0 : index
      %c0_12 = arith.constant 0 : index
      %13 = vector.load %arg7[%c0_11, %c0_12] : memref<8x128xf32, #tpu.memory_space<vmem>>, vector<8x128xf32>
      tpu.vector_store %arg7[%c0_11, %c0_12], %12 {strides = array<i32>} : memref<8x128xf32, #tpu.memory_space<vmem>>, vector<8x128xf32>,
    } else {
    }
    %c0 = arith.constant 0 : index
    %c0_1 = arith.constant 0 : index
    %3 = vector.load %arg7[%c0, %c0_1] : memref<8x128xf32, #tpu.memory_space<vmem>>, vector<8x128xf32>
    %c0_2 = arith.constant 0 : index
    %c0_3 = arith.constant 0 : index
    %4 = vector.load %arg2[%c0_2, %c0_3] : memref<8x288xbf16, #tpu.memory_space<vmem>>, vector<8x288xbf16>
    %c0_4 = arith.constant 0 : index
    %c0_5 = arith.constant 0 : index
    %5 = vector.load %arg3[%c0_4, %c0_5] : memref<288x128xbf16, #tpu.memory_space<vmem>>, vector<288x128xbf16>
    %cst = arith.constant dense<0.000000e+00> : vector<8x128xf32>
    %6 = tpu.matmul %4, %5, %cst {dimension_numbers = #tpu.dot_dimension_numbers<[1], [0], [0], [1], [0, 0, 1, 1], [], []>} : vector<8x288xbf16>, vector<288x128xbf16>, vector<8x128xf32> -> vector<8x128xf32>
    %7 = arith.addf %3, %6 : vector<8x128xf32>
    %c0_6 = arith.constant 0 : index
    %c0_7 = arith.constant 0 : index
    %8 = vector.load %arg7[%c0_6, %c0_7] : memref<8x128xf32, #tpu.memory_space<vmem>>, vector<8x128xf32>
    tpu.vector_store %arg7[%c0_6, %c0_7], %7 {strides = array<i32>} : memref<8x128xf32, #tpu.memory_space<vmem>>, vector<8x128xf32>,
    %c0_i32_8 = arith.constant 0 : i32
    %9 = arith.cmpi eq, %arg1, %c0_i32_8 : i32
    %10 = arith.extui %9 : i1 to i32
    %c0_i32_9 = arith.constant 0 : i32
    %11 = arith.cmpi ne, %10, %c0_i32_9 : i32
    scf.if %11 {
      %c0_10 = arith.constant 0 : index
      %c0_11 = arith.constant 0 : index
      %12 = vector.load %arg7[%c0_10, %c0_11] : memref<8x128xf32, #tpu.memory_space<vmem>>, vector<8x128xf32>
      %c0_12 = arith.constant 0 : index
      %c0_13 = arith.constant 0 : index
      %13 = vector.load %arg4[%c0_12, %c0_13] : memref<8x1xf32, #tpu.memory_space<vmem>>, vector<8x1xf32>
      %14 = vector.broadcast %13 : vector<8x1xf32> to vector<8x128xf32>
      %15 = arith.addf %12, %14 : vector<8x128xf32>
      %c0_14 = arith.constant 0 : index
      %16 = memref.load %arg5[%c0_14] : memref<1xf32, #tpu.memory_space<smem>>
      %cst_15 = arith.constant 0.000000e+00 : f32
      %17 = vector.broadcast %cst_15 : f32 to vector<8x128xf32>
      %18 = arith.cmpf oge, %15, %17 : vector<8x128xf32>
      %19 = vector.broadcast %16 : f32 to vector<8x128xf32>
      %20 = arith.mulf %19, %15 : vector<8x128xf32>
      %21 = arith.select %18, %15, %20 : vector<8x128xi1>, vector<8x128xf32>
      %22 = arith.truncf %21 : vector<8x128xf32> to vector<8x128xbf16>
      %c0_16 = arith.constant 0 : index
      %c0_17 = arith.constant 0 : index
      %23 = vector.load %arg6[%c0_16, %c0_17] : memref<8x128xbf16, #tpu.memory_space<vmem>>, vector<8x128xbf16>
      tpu.vector_store %arg6[%c0_16, %c0_17], %22 {strides = array<i32>} : memref<8x128xbf16, #tpu.memory_space<vmem>>, vector<8x128xbf16>,
    } else {
    }
    return
  }
  func.func @transform_0(%arg0: i32, %arg1: i32) -> (i32, i32) {
    %c0_i32 = arith.constant 0 : i32
    %c0_i32_0 = arith.constant 0 : i32
    return %c0_i32, %arg1 : i32, i32
  }
  func.func @transform_1(%arg0: i32, %arg1: i32) -> (i32, i32) {
    %c0_i32 = arith.constant 0 : i32
    return %arg1, %arg0 : i32, i32
  }
  func.func @transform_2(%arg0: i32, %arg1: i32) -> (i32, i32) {
    %c0_i32 = arith.constant 0 : i32
    %c0_i32_0 = arith.constant 0 : i32
    %c0_i32_1 = arith.constant 0 : i32
    return %c0_i32, %c0_i32_0 : i32, i32
  }
  func.func @transform_3(%arg0: i32, %arg1: i32) -> i32 {
    %c0_i32 = arith.constant 0 : i32
    %c0_i32_0 = arith.constant 0 : i32
    return %c0_i32 : i32
  }
  func.func @transform_4(%arg0: i32, %arg1: i32) -> (i32, i32) {
    %c0_i32 = arith.constant 0 : i32
    %c0_i32_0 = arith.constant 0 : i32
    return %c0_i32, %arg0 : i32, i32
  }
}

module attributes {stable_mosaic.version = 11 : i64} {
  func.func @_gemm_prelu_res_kernel(%arg0: i32, %arg1: i32, %arg2: memref<8x288xbf16, #tpu.memory_space<vmem>>, %arg3: memref<288x128xbf16, #tpu.memory_space<vmem>>, %arg4: memref<8x1xf32, #tpu.memory_space<vmem>>, %arg5: memref<1xf32, #tpu.memory_space<smem>>, %arg6: memref<8x128xbf16, #tpu.memory_space<vmem>>, %arg7: memref<8x128xbf16, #tpu.memory_space<vmem>>, %arg8: memref<8x128xf32, #tpu.memory_space<vmem>>) attributes {dimension_semantics = [#tpu.dimension_semantics<parallel>, #tpu.dimension_semantics<arbitrary>], iteration_bounds = array<i64: 1, 1>, scalar_prefetch = 0 : i64, scratch_operands = 1 : i64, tpu.core_type = #tpu.core_type<tc>, window_params = [{transform_indices = @transform_0, window_bounds = array<i64: 8, 288>}, {transform_indices = @transform_1, window_bounds = array<i64: 288, 128>}, {pipeline_mode = #tpu.pipeline_mode<synchronous>, transform_indices = @transform_2, window_bounds = array<i64: 8, 1>}, {transform_indices = @transform_3, window_bounds = array<i64: 1>}, {transform_indices = @transform_4, window_bounds = array<i64: 8, 128>}, {transform_indices = @transform_5, window_bounds = array<i64: 8, 128>}]} {
    %c0_i32 = arith.constant 0 : i32
    %0 = arith.cmpi eq, %arg1, %c0_i32 : i32
    %1 = arith.extui %0 : i1 to i32
    %c0_i32_0 = arith.constant 0 : i32
    %2 = arith.cmpi ne, %1, %c0_i32_0 : i32
    scf.if %2 {
      %cst_10 = arith.constant 0.000000e+00 : f32
      %12 = vector.broadcast %cst_10 : f32 to vector<8x128xf32>
      %c0_11 = arith.constant 0 : index
      %c0_12 = arith.constant 0 : index
      %13 = vector.load %arg8[%c0_11, %c0_12] : memref<8x128xf32, #tpu.memory_space<vmem>>, vector<8x128xf32>
      tpu.vector_store %arg8[%c0_11, %c0_12], %12 {strides = array<i32>} : memref<8x128xf32, #tpu.memory_space<vmem>>, vector<8x128xf32>,
    } else {
    }
    %c0 = arith.constant 0 : index
    %c0_1 = arith.constant 0 : index
    %3 = vector.load %arg8[%c0, %c0_1] : memref<8x128xf32, #tpu.memory_space<vmem>>, vector<8x128xf32>
    %c0_2 = arith.constant 0 : index
    %c0_3 = arith.constant 0 : index
    %4 = vector.load %arg2[%c0_2, %c0_3] : memref<8x288xbf16, #tpu.memory_space<vmem>>, vector<8x288xbf16>
    %c0_4 = arith.constant 0 : index
    %c0_5 = arith.constant 0 : index
    %5 = vector.load %arg3[%c0_4, %c0_5] : memref<288x128xbf16, #tpu.memory_space<vmem>>, vector<288x128xbf16>
    %cst = arith.constant dense<0.000000e+00> : vector<8x128xf32>
    %6 = tpu.matmul %4, %5, %cst {dimension_numbers = #tpu.dot_dimension_numbers<[1], [0], [0], [1], [0, 0, 1, 1], [], []>} : vector<8x288xbf16>, vector<288x128xbf16>, vector<8x128xf32> -> vector<8x128xf32>
    %7 = arith.addf %3, %6 : vector<8x128xf32>
    %c0_6 = arith.constant 0 : index
    %c0_7 = arith.constant 0 : index
    %8 = vector.load %arg8[%c0_6, %c0_7] : memref<8x128xf32, #tpu.memory_space<vmem>>, vector<8x128xf32>
    tpu.vector_store %arg8[%c0_6, %c0_7], %7 {strides = array<i32>} : memref<8x128xf32, #tpu.memory_space<vmem>>, vector<8x128xf32>,
    %c0_i32_8 = arith.constant 0 : i32
    %9 = arith.cmpi eq, %arg1, %c0_i32_8 : i32
    %10 = arith.extui %9 : i1 to i32
    %c0_i32_9 = arith.constant 0 : i32
    %11 = arith.cmpi ne, %10, %c0_i32_9 : i32
    scf.if %11 {
      %c0_10 = arith.constant 0 : index
      %c0_11 = arith.constant 0 : index
      %12 = vector.load %arg8[%c0_10, %c0_11] : memref<8x128xf32, #tpu.memory_space<vmem>>, vector<8x128xf32>
      %c0_12 = arith.constant 0 : index
      %c0_13 = arith.constant 0 : index
      %13 = vector.load %arg4[%c0_12, %c0_13] : memref<8x1xf32, #tpu.memory_space<vmem>>, vector<8x1xf32>
      %14 = vector.broadcast %13 : vector<8x1xf32> to vector<8x128xf32>
      %15 = arith.addf %12, %14 : vector<8x128xf32>
      %c0_14 = arith.constant 0 : index
      %16 = memref.load %arg5[%c0_14] : memref<1xf32, #tpu.memory_space<smem>>
      %cst_15 = arith.constant 0.000000e+00 : f32
      %17 = vector.broadcast %cst_15 : f32 to vector<8x128xf32>
      %18 = arith.cmpf oge, %15, %17 : vector<8x128xf32>
      %19 = vector.broadcast %16 : f32 to vector<8x128xf32>
      %20 = arith.mulf %19, %15 : vector<8x128xf32>
      %21 = arith.select %18, %15, %20 : vector<8x128xi1>, vector<8x128xf32>
      %c0_16 = arith.constant 0 : index
      %c0_17 = arith.constant 0 : index
      %22 = vector.load %arg6[%c0_16, %c0_17] : memref<8x128xbf16, #tpu.memory_space<vmem>>, vector<8x128xbf16>
      %23 = arith.extf %22 : vector<8x128xbf16> to vector<8x128xf32>
      %24 = arith.addf %21, %23 : vector<8x128xf32>
      %25 = arith.truncf %24 : vector<8x128xf32> to vector<8x128xbf16>
      %c0_18 = arith.constant 0 : index
      %c0_19 = arith.constant 0 : index
      %26 = vector.load %arg7[%c0_18, %c0_19] : memref<8x128xbf16, #tpu.memory_space<vmem>>, vector<8x128xbf16>
      tpu.vector_store %arg7[%c0_18, %c0_19], %25 {strides = array<i32>} : memref<8x128xbf16, #tpu.memory_space<vmem>>, vector<8x128xbf16>,
    } else {
    }
    return
  }
  func.func @transform_0(%arg0: i32, %arg1: i32) -> (i32, i32) {
    %c0_i32 = arith.constant 0 : i32
    %c0_i32_0 = arith.constant 0 : i32
    return %c0_i32, %arg1 : i32, i32
  }
  func.func @transform_1(%arg0: i32, %arg1: i32) -> (i32, i32) {
    %c0_i32 = arith.constant 0 : i32
    return %arg1, %arg0 : i32, i32
  }
  func.func @transform_2(%arg0: i32, %arg1: i32) -> (i32, i32) {
    %c0_i32 = arith.constant 0 : i32
    %c0_i32_0 = arith.constant 0 : i32
    %c0_i32_1 = arith.constant 0 : i32
    return %c0_i32, %c0_i32_0 : i32, i32
  }
  func.func @transform_3(%arg0: i32, %arg1: i32) -> i32 {
    %c0_i32 = arith.constant 0 : i32
    %c0_i32_0 = arith.constant 0 : i32
    return %c0_i32 : i32
  }
  func.func @transform_4(%arg0: i32, %arg1: i32) -> (i32, i32) {
    %c0_i32 = arith.constant 0 : i32
    %c0_i32_0 = arith.constant 0 : i32
    return %c0_i32, %arg0 : i32, i32
  }
  func.func @transform_5(%arg0: i32, %arg1: i32) -> (i32, i32) {
    %c0_i32 = arith.constant 0 : i32
    %c0_i32_0 = arith.constant 0 : i32
    return %c0_i32, %arg0 : i32, i32
  }
}

module attributes {stable_mosaic.version = 11 : i64} {
  func.func @_gemm_prelu_res_kernel(%arg0: i32, %arg1: i32, %arg2: memref<32x72xbf16, #tpu.memory_space<vmem>>, %arg3: memref<72x128xbf16, #tpu.memory_space<vmem>>, %arg4: memref<32x1xf32, #tpu.memory_space<vmem>>, %arg5: memref<1xf32, #tpu.memory_space<smem>>, %arg6: memref<32x128xbf16, #tpu.memory_space<vmem>>, %arg7: memref<32x128xbf16, #tpu.memory_space<vmem>>, %arg8: memref<32x128xf32, #tpu.memory_space<vmem>>) attributes {dimension_semantics = [#tpu.dimension_semantics<parallel>, #tpu.dimension_semantics<arbitrary>], iteration_bounds = array<i64: 1, 1>, scalar_prefetch = 0 : i64, scratch_operands = 1 : i64, tpu.core_type = #tpu.core_type<tc>, window_params = [{transform_indices = @transform_0, window_bounds = array<i64: 32, 72>}, {transform_indices = @transform_1, window_bounds = array<i64: 72, 128>}, {pipeline_mode = #tpu.pipeline_mode<synchronous>, transform_indices = @transform_2, window_bounds = array<i64: 32, 1>}, {transform_indices = @transform_3, window_bounds = array<i64: 1>}, {transform_indices = @transform_4, window_bounds = array<i64: 32, 128>}, {transform_indices = @transform_5, window_bounds = array<i64: 32, 128>}]} {
    %c0_i32 = arith.constant 0 : i32
    %0 = arith.cmpi eq, %arg1, %c0_i32 : i32
    %1 = arith.extui %0 : i1 to i32
    %c0_i32_0 = arith.constant 0 : i32
    %2 = arith.cmpi ne, %1, %c0_i32_0 : i32
    scf.if %2 {
      %cst_10 = arith.constant 0.000000e+00 : f32
      %12 = vector.broadcast %cst_10 : f32 to vector<32x128xf32>
      %c0_11 = arith.constant 0 : index
      %c0_12 = arith.constant 0 : index
      %13 = vector.load %arg8[%c0_11, %c0_12] : memref<32x128xf32, #tpu.memory_space<vmem>>, vector<32x128xf32>
      tpu.vector_store %arg8[%c0_11, %c0_12], %12 {strides = array<i32>} : memref<32x128xf32, #tpu.memory_space<vmem>>, vector<32x128xf32>,
    } else {
    }
    %c0 = arith.constant 0 : index
    %c0_1 = arith.constant 0 : index
    %3 = vector.load %arg8[%c0, %c0_1] : memref<32x128xf32, #tpu.memory_space<vmem>>, vector<32x128xf32>
    %c0_2 = arith.constant 0 : index
    %c0_3 = arith.constant 0 : index
    %4 = vector.load %arg2[%c0_2, %c0_3] : memref<32x72xbf16, #tpu.memory_space<vmem>>, vector<32x72xbf16>
    %c0_4 = arith.constant 0 : index
    %c0_5 = arith.constant 0 : index
    %5 = vector.load %arg3[%c0_4, %c0_5] : memref<72x128xbf16, #tpu.memory_space<vmem>>, vector<72x128xbf16>
    %cst = arith.constant dense<0.000000e+00> : vector<32x128xf32>
    %6 = tpu.matmul %4, %5, %cst {dimension_numbers = #tpu.dot_dimension_numbers<[1], [0], [0], [1], [0, 0, 1, 1], [], []>} : vector<32x72xbf16>, vector<72x128xbf16>, vector<32x128xf32> -> vector<32x128xf32>
    %7 = arith.addf %3, %6 : vector<32x128xf32>
    %c0_6 = arith.constant 0 : index
    %c0_7 = arith.constant 0 : index
    %8 = vector.load %arg8[%c0_6, %c0_7] : memref<32x128xf32, #tpu.memory_space<vmem>>, vector<32x128xf32>
    tpu.vector_store %arg8[%c0_6, %c0_7], %7 {strides = array<i32>} : memref<32x128xf32, #tpu.memory_space<vmem>>, vector<32x128xf32>,
    %c0_i32_8 = arith.constant 0 : i32
    %9 = arith.cmpi eq, %arg1, %c0_i32_8 : i32
    %10 = arith.extui %9 : i1 to i32
    %c0_i32_9 = arith.constant 0 : i32
    %11 = arith.cmpi ne, %10, %c0_i32_9 : i32
    scf.if %11 {
      %c0_10 = arith.constant 0 : index
      %c0_11 = arith.constant 0 : index
      %12 = vector.load %arg8[%c0_10, %c0_11] : memref<32x128xf32, #tpu.memory_space<vmem>>, vector<32x128xf32>
      %c0_12 = arith.constant 0 : index
      %c0_13 = arith.constant 0 : index
      %13 = vector.load %arg4[%c0_12, %c0_13] : memref<32x1xf32, #tpu.memory_space<vmem>>, vector<32x1xf32>
      %14 = vector.broadcast %13 : vector<32x1xf32> to vector<32x128xf32>
      %15 = arith.addf %12, %14 : vector<32x128xf32>
      %c0_14 = arith.constant 0 : index
      %16 = memref.load %arg5[%c0_14] : memref<1xf32, #tpu.memory_space<smem>>
      %cst_15 = arith.constant 0.000000e+00 : f32
      %17 = vector.broadcast %cst_15 : f32 to vector<32x128xf32>
      %18 = arith.cmpf oge, %15, %17 : vector<32x128xf32>
      %19 = vector.broadcast %16 : f32 to vector<32x128xf32>
      %20 = arith.mulf %19, %15 : vector<32x128xf32>
      %21 = arith.select %18, %15, %20 : vector<32x128xi1>, vector<32x128xf32>
      %c0_16 = arith.constant 0 : index
      %c0_17 = arith.constant 0 : index
      %22 = vector.load %arg6[%c0_16, %c0_17] : memref<32x128xbf16, #tpu.memory_space<vmem>>, vector<32x128xbf16>
      %23 = arith.extf %22 : vector<32x128xbf16> to vector<32x128xf32>
      %24 = arith.subf %21, %23 : vector<32x128xf32>
      %25 = arith.truncf %24 : vector<32x128xf32> to vector<32x128xbf16>
      %c0_18 = arith.constant 0 : index
      %c0_19 = arith.constant 0 : index
      %26 = vector.load %arg7[%c0_18, %c0_19] : memref<32x128xbf16, #tpu.memory_space<vmem>>, vector<32x128xbf16>
      tpu.vector_store %arg7[%c0_18, %c0_19], %25 {strides = array<i32>} : memref<32x128xbf16, #tpu.memory_space<vmem>>, vector<32x128xbf16>,
    } else {
    }
    return
  }
  func.func @transform_0(%arg0: i32, %arg1: i32) -> (i32, i32) {
    %c0_i32 = arith.constant 0 : i32
    %c0_i32_0 = arith.constant 0 : i32
    return %c0_i32, %arg1 : i32, i32
  }
  func.func @transform_1(%arg0: i32, %arg1: i32) -> (i32, i32) {
    %c0_i32 = arith.constant 0 : i32
    return %arg1, %arg0 : i32, i32
  }
  func.func @transform_2(%arg0: i32, %arg1: i32) -> (i32, i32) {
    %c0_i32 = arith.constant 0 : i32
    %c0_i32_0 = arith.constant 0 : i32
    %c0_i32_1 = arith.constant 0 : i32
    return %c0_i32, %c0_i32_0 : i32, i32
  }
  func.func @transform_3(%arg0: i32, %arg1: i32) -> i32 {
    %c0_i32 = arith.constant 0 : i32
    %c0_i32_0 = arith.constant 0 : i32
    return %c0_i32 : i32
  }
  func.func @transform_4(%arg0: i32, %arg1: i32) -> (i32, i32) {
    %c0_i32 = arith.constant 0 : i32
    %c0_i32_0 = arith.constant 0 : i32
    return %c0_i32, %arg0 : i32, i32
  }
  func.func @transform_5(%arg0: i32, %arg1: i32) -> (i32, i32) {
    %c0_i32 = arith.constant 0 : i32
    %c0_i32_0 = arith.constant 0 : i32
    return %c0_i32, %arg0 : i32, i32
  }
}

module attributes {stable_mosaic.version = 11 : i64} {
  func.func @_gemm_prelu_kernel(%arg0: i32, %arg1: i32, %arg2: memref<8x16xbf16, #tpu.memory_space<vmem>>, %arg3: memref<16x512xbf16, #tpu.memory_space<vmem>>, %arg4: memref<8x1xf32, #tpu.memory_space<vmem>>, %arg5: memref<1xf32, #tpu.memory_space<smem>>, %arg6: memref<8x512xbf16, #tpu.memory_space<vmem>>, %arg7: memref<8x512xf32, #tpu.memory_space<vmem>>) attributes {dimension_semantics = [#tpu.dimension_semantics<parallel>, #tpu.dimension_semantics<arbitrary>], iteration_bounds = array<i64: 1, 1>, scalar_prefetch = 0 : i64, scratch_operands = 1 : i64, tpu.core_type = #tpu.core_type<tc>, window_params = [{transform_indices = @transform_0, window_bounds = array<i64: 8, 16>}, {transform_indices = @transform_1, window_bounds = array<i64: 16, 512>}, {pipeline_mode = #tpu.pipeline_mode<synchronous>, transform_indices = @transform_2, window_bounds = array<i64: 8, 1>}, {transform_indices = @transform_3, window_bounds = array<i64: 1>}, {transform_indices = @transform_4, window_bounds = array<i64: 8, 512>}]} {
    %c0_i32 = arith.constant 0 : i32
    %0 = arith.cmpi eq, %arg1, %c0_i32 : i32
    %1 = arith.extui %0 : i1 to i32
    %c0_i32_0 = arith.constant 0 : i32
    %2 = arith.cmpi ne, %1, %c0_i32_0 : i32
    scf.if %2 {
      %cst_10 = arith.constant 0.000000e+00 : f32
      %12 = vector.broadcast %cst_10 : f32 to vector<8x512xf32>
      %c0_11 = arith.constant 0 : index
      %c0_12 = arith.constant 0 : index
      %13 = vector.load %arg7[%c0_11, %c0_12] : memref<8x512xf32, #tpu.memory_space<vmem>>, vector<8x512xf32>
      tpu.vector_store %arg7[%c0_11, %c0_12], %12 {strides = array<i32>} : memref<8x512xf32, #tpu.memory_space<vmem>>, vector<8x512xf32>,
    } else {
    }
    %c0 = arith.constant 0 : index
    %c0_1 = arith.constant 0 : index
    %3 = vector.load %arg7[%c0, %c0_1] : memref<8x512xf32, #tpu.memory_space<vmem>>, vector<8x512xf32>
    %c0_2 = arith.constant 0 : index
    %c0_3 = arith.constant 0 : index
    %4 = vector.load %arg2[%c0_2, %c0_3] : memref<8x16xbf16, #tpu.memory_space<vmem>>, vector<8x16xbf16>
    %c0_4 = arith.constant 0 : index
    %c0_5 = arith.constant 0 : index
    %5 = vector.load %arg3[%c0_4, %c0_5] : memref<16x512xbf16, #tpu.memory_space<vmem>>, vector<16x512xbf16>
    %cst = arith.constant dense<0.000000e+00> : vector<8x512xf32>
    %6 = tpu.matmul %4, %5, %cst {dimension_numbers = #tpu.dot_dimension_numbers<[1], [0], [0], [1], [0, 0, 1, 1], [], []>} : vector<8x16xbf16>, vector<16x512xbf16>, vector<8x512xf32> -> vector<8x512xf32>
    %7 = arith.addf %3, %6 : vector<8x512xf32>
    %c0_6 = arith.constant 0 : index
    %c0_7 = arith.constant 0 : index
    %8 = vector.load %arg7[%c0_6, %c0_7] : memref<8x512xf32, #tpu.memory_space<vmem>>, vector<8x512xf32>
    tpu.vector_store %arg7[%c0_6, %c0_7], %7 {strides = array<i32>} : memref<8x512xf32, #tpu.memory_space<vmem>>, vector<8x512xf32>,
    %c0_i32_8 = arith.constant 0 : i32
    %9 = arith.cmpi eq, %arg1, %c0_i32_8 : i32
    %10 = arith.extui %9 : i1 to i32
    %c0_i32_9 = arith.constant 0 : i32
    %11 = arith.cmpi ne, %10, %c0_i32_9 : i32
    scf.if %11 {
      %c0_10 = arith.constant 0 : index
      %c0_11 = arith.constant 0 : index
      %12 = vector.load %arg7[%c0_10, %c0_11] : memref<8x512xf32, #tpu.memory_space<vmem>>, vector<8x512xf32>
      %c0_12 = arith.constant 0 : index
      %c0_13 = arith.constant 0 : index
      %13 = vector.load %arg4[%c0_12, %c0_13] : memref<8x1xf32, #tpu.memory_space<vmem>>, vector<8x1xf32>
      %14 = vector.broadcast %13 : vector<8x1xf32> to vector<8x512xf32>
      %15 = arith.addf %12, %14 : vector<8x512xf32>
      %c0_14 = arith.constant 0 : index
      %16 = memref.load %arg5[%c0_14] : memref<1xf32, #tpu.memory_space<smem>>
      %cst_15 = arith.constant 0.000000e+00 : f32
      %17 = vector.broadcast %cst_15 : f32 to vector<8x512xf32>
      %18 = arith.cmpf oge, %15, %17 : vector<8x512xf32>
      %19 = vector.broadcast %16 : f32 to vector<8x512xf32>
      %20 = arith.mulf %19, %15 : vector<8x512xf32>
      %21 = arith.select %18, %15, %20 : vector<8x512xi1>, vector<8x512xf32>
      %22 = arith.truncf %21 : vector<8x512xf32> to vector<8x512xbf16>
      %c0_16 = arith.constant 0 : index
      %c0_17 = arith.constant 0 : index
      %23 = vector.load %arg6[%c0_16, %c0_17] : memref<8x512xbf16, #tpu.memory_space<vmem>>, vector<8x512xbf16>
      tpu.vector_store %arg6[%c0_16, %c0_17], %22 {strides = array<i32>} : memref<8x512xbf16, #tpu.memory_space<vmem>>, vector<8x512xbf16>,
    } else {
    }
    return
  }
  func.func @transform_0(%arg0: i32, %arg1: i32) -> (i32, i32) {
    %c0_i32 = arith.constant 0 : i32
    %c0_i32_0 = arith.constant 0 : i32
    return %c0_i32, %arg1 : i32, i32
  }
  func.func @transform_1(%arg0: i32, %arg1: i32) -> (i32, i32) {
    %c0_i32 = arith.constant 0 : i32
    return %arg1, %arg0 : i32, i32
  }
  func.func @transform_2(%arg0: i32, %arg1: i32) -> (i32, i32) {
    %c0_i32 = arith.constant 0 : i32
    %c0_i32_0 = arith.constant 0 : i32
    %c0_i32_1 = arith.constant 0 : i32
    return %c0_i32, %c0_i32_0 : i32, i32
  }
  func.func @transform_3(%arg0: i32, %arg1: i32) -> i32 {
    %c0_i32 = arith.constant 0 : i32
    %c0_i32_0 = arith.constant 0 : i32
    return %c0_i32 : i32
  }
  func.func @transform_4(%arg0: i32, %arg1: i32) -> (i32, i32) {
    %c0_i32 = arith.constant 0 : i32
    %c0_i32_0 = arith.constant 0 : i32
    return %c0_i32, %arg0 : i32, i32
  }
}

module attributes {stable_mosaic.version = 11 : i64} {
  func.func @_gemm_prelu_kernel(%arg0: i32, %arg1: i32, %arg2: memref<8x16xbf16, #tpu.memory_space<vmem>>, %arg3: memref<16x128xbf16, #tpu.memory_space<vmem>>, %arg4: memref<8x1xf32, #tpu.memory_space<vmem>>, %arg5: memref<1xf32, #tpu.memory_space<smem>>, %arg6: memref<8x128xbf16, #tpu.memory_space<vmem>>, %arg7: memref<8x128xf32, #tpu.memory_space<vmem>>) attributes {dimension_semantics = [#tpu.dimension_semantics<parallel>, #tpu.dimension_semantics<arbitrary>], iteration_bounds = array<i64: 1, 1>, scalar_prefetch = 0 : i64, scratch_operands = 1 : i64, tpu.core_type = #tpu.core_type<tc>, window_params = [{transform_indices = @transform_0, window_bounds = array<i64: 8, 16>}, {transform_indices = @transform_1, window_bounds = array<i64: 16, 128>}, {pipeline_mode = #tpu.pipeline_mode<synchronous>, transform_indices = @transform_2, window_bounds = array<i64: 8, 1>}, {transform_indices = @transform_3, window_bounds = array<i64: 1>}, {transform_indices = @transform_4, window_bounds = array<i64: 8, 128>}]} {
    %c0_i32 = arith.constant 0 : i32
    %0 = arith.cmpi eq, %arg1, %c0_i32 : i32
    %1 = arith.extui %0 : i1 to i32
    %c0_i32_0 = arith.constant 0 : i32
    %2 = arith.cmpi ne, %1, %c0_i32_0 : i32
    scf.if %2 {
      %cst_10 = arith.constant 0.000000e+00 : f32
      %12 = vector.broadcast %cst_10 : f32 to vector<8x128xf32>
      %c0_11 = arith.constant 0 : index
      %c0_12 = arith.constant 0 : index
      %13 = vector.load %arg7[%c0_11, %c0_12] : memref<8x128xf32, #tpu.memory_space<vmem>>, vector<8x128xf32>
      tpu.vector_store %arg7[%c0_11, %c0_12], %12 {strides = array<i32>} : memref<8x128xf32, #tpu.memory_space<vmem>>, vector<8x128xf32>,
    } else {
    }
    %c0 = arith.constant 0 : index
    %c0_1 = arith.constant 0 : index
    %3 = vector.load %arg7[%c0, %c0_1] : memref<8x128xf32, #tpu.memory_space<vmem>>, vector<8x128xf32>
    %c0_2 = arith.constant 0 : index
    %c0_3 = arith.constant 0 : index
    %4 = vector.load %arg2[%c0_2, %c0_3] : memref<8x16xbf16, #tpu.memory_space<vmem>>, vector<8x16xbf16>
    %c0_4 = arith.constant 0 : index
    %c0_5 = arith.constant 0 : index
    %5 = vector.load %arg3[%c0_4, %c0_5] : memref<16x128xbf16, #tpu.memory_space<vmem>>, vector<16x128xbf16>
    %cst = arith.constant dense<0.000000e+00> : vector<8x128xf32>
    %6 = tpu.matmul %4, %5, %cst {dimension_numbers = #tpu.dot_dimension_numbers<[1], [0], [0], [1], [0, 0, 1, 1], [], []>} : vector<8x16xbf16>, vector<16x128xbf16>, vector<8x128xf32> -> vector<8x128xf32>
    %7 = arith.addf %3, %6 : vector<8x128xf32>
    %c0_6 = arith.constant 0 : index
    %c0_7 = arith.constant 0 : index
    %8 = vector.load %arg7[%c0_6, %c0_7] : memref<8x128xf32, #tpu.memory_space<vmem>>, vector<8x128xf32>
    tpu.vector_store %arg7[%c0_6, %c0_7], %7 {strides = array<i32>} : memref<8x128xf32, #tpu.memory_space<vmem>>, vector<8x128xf32>,
    %c0_i32_8 = arith.constant 0 : i32
    %9 = arith.cmpi eq, %arg1, %c0_i32_8 : i32
    %10 = arith.extui %9 : i1 to i32
    %c0_i32_9 = arith.constant 0 : i32
    %11 = arith.cmpi ne, %10, %c0_i32_9 : i32
    scf.if %11 {
      %c0_10 = arith.constant 0 : index
      %c0_11 = arith.constant 0 : index
      %12 = vector.load %arg7[%c0_10, %c0_11] : memref<8x128xf32, #tpu.memory_space<vmem>>, vector<8x128xf32>
      %c0_12 = arith.constant 0 : index
      %c0_13 = arith.constant 0 : index
      %13 = vector.load %arg4[%c0_12, %c0_13] : memref<8x1xf32, #tpu.memory_space<vmem>>, vector<8x1xf32>
      %14 = vector.broadcast %13 : vector<8x1xf32> to vector<8x128xf32>
      %15 = arith.addf %12, %14 : vector<8x128xf32>
      %c0_14 = arith.constant 0 : index
      %16 = memref.load %arg5[%c0_14] : memref<1xf32, #tpu.memory_space<smem>>
      %cst_15 = arith.constant 0.000000e+00 : f32
      %17 = vector.broadcast %cst_15 : f32 to vector<8x128xf32>
      %18 = arith.cmpf oge, %15, %17 : vector<8x128xf32>
      %19 = vector.broadcast %16 : f32 to vector<8x128xf32>
      %20 = arith.mulf %19, %15 : vector<8x128xf32>
      %21 = arith.select %18, %15, %20 : vector<8x128xi1>, vector<8x128xf32>
      %22 = arith.truncf %21 : vector<8x128xf32> to vector<8x128xbf16>
      %c0_16 = arith.constant 0 : index
      %c0_17 = arith.constant 0 : index
      %23 = vector.load %arg6[%c0_16, %c0_17] : memref<8x128xbf16, #tpu.memory_space<vmem>>, vector<8x128xbf16>
      tpu.vector_store %arg6[%c0_16, %c0_17], %22 {strides = array<i32>} : memref<8x128xbf16, #tpu.memory_space<vmem>>, vector<8x128xbf16>,
    } else {
    }
    return
  }
  func.func @transform_0(%arg0: i32, %arg1: i32) -> (i32, i32) {
    %c0_i32 = arith.constant 0 : i32
    %c0_i32_0 = arith.constant 0 : i32
    return %c0_i32, %arg1 : i32, i32
  }
  func.func @transform_1(%arg0: i32, %arg1: i32) -> (i32, i32) {
    %c0_i32 = arith.constant 0 : i32
    return %arg1, %arg0 : i32, i32
  }
  func.func @transform_2(%arg0: i32, %arg1: i32) -> (i32, i32) {
    %c0_i32 = arith.constant 0 : i32
    %c0_i32_0 = arith.constant 0 : i32
    %c0_i32_1 = arith.constant 0 : i32
    return %c0_i32, %c0_i32_0 : i32, i32
  }
  func.func @transform_3(%arg0: i32, %arg1: i32) -> i32 {
    %c0_i32 = arith.constant 0 : i32
    %c0_i32_0 = arith.constant 0 : i32
    return %c0_i32 : i32
  }
  func.func @transform_4(%arg0: i32, %arg1: i32) -> (i32, i32) {
    %c0_i32 = arith.constant 0 : i32
    %c0_i32_0 = arith.constant 0 : i32
    return %c0_i32, %arg0 : i32, i32
  }
}

</mosaic_0001>

<llo_original>
// kernel: densebackproj_forward.17
$region0: #{densebackproj_forward.17}
  #allocation0 [shape = 'u32[]', space=smem, size = 0x4, offset = 0x4, fixed_abs, tag = 'smem constant byte address 0x4 - core index']
  #allocation1 [shape = 'u32[144,128]{1,0:T(1,128)}', space=vmem, size = 0x12000, scoped, tag = 'internal scratch']
  #allocation2 [shape = 'f32[32,128]{1,0:T(8,128)}', space=vmem, size = 0x4000, scoped, tag = 'scratch operand']
  #allocation3 [shape = 'f32[1]{0:T(128)S(6)}', space=smem, size = 0x200, scoped, tag = 'scoped memory for densebackproj_forward.17']
  %s0 = inlined_call_operand.vmem [shape: bf16[32,72], index: 0, kind: input, shape index: {}]
  %s1 = inlined_call_operand.vmem [shape: bf16[72,128], index: 1, kind: input, shape index: {}]
  %s2 = inlined_call_operand.vmem [shape: f32[32,1], index: 2, kind: input, shape index: {}]
  %s3 = inlined_call_operand.<no memory space> [shape: f32[1], index: 3, kind: input, shape index: {}]
  %s4 = inlined_call_operand.vmem [shape: bf16[32,128], index: 4, kind: output, shape index: {}]
  %s5 = sld [smem:[#allocation0]]
  $region34: #{densebackproj_forward.17} parent=0
    _
  %s7 = ssub.s32 1, %s5
  %s8 = scalar_select 0, %s7, %s5
  %9 = sst [smem:[#allocation3]] %s3
  // Predicated region
  $region2: #{densebackproj_forward.17} parent=0 // pred_check
    _
  $region3: #{densebackproj_forward.17} parent=0 // pred_check_branch
    %11 = sbr.rel (0) target = $region5
  $region4: #{densebackproj_forward.17} parent=0 // pred_region
    _
  $region5: #{densebackproj_forward.17} parent=0 // pred_fallthru
    _
  // Predicated region
  $region6: #{densebackproj_forward.17} parent=0 // pred_check
    _
  $region7: #{densebackproj_forward.17} parent=0 // pred_check_branch
    %13 = sbr.rel (0) target = $region9
  $region8: #{densebackproj_forward.17} parent=0 // pred_region
    _
  $region9: #{densebackproj_forward.17} parent=0 // pred_fallthru
    _
  // Predicated region
  $region10: #{densebackproj_forward.17} parent=0 // pred_check
    _
  $region11: #{densebackproj_forward.17} parent=0 // pred_check_branch
    %15 = sbr.rel (0) target = $region13
  $region12: #{densebackproj_forward.17} parent=0 // pred_region
    _
  $region13: #{densebackproj_forward.17} parent=0 // pred_fallthru
    _
  // Predicated region
  $region14: #{densebackproj_forward.17} parent=0 // pred_check
    _
  $region15: #{densebackproj_forward.17} parent=0 // pred_check_branch
    %17 = sbr.rel (0) target = $region17
  $region16: #{densebackproj_forward.17} parent=0 // pred_region
    _
  $region17: #{densebackproj_forward.17} parent=0 // pred_fallthru
    _
  %p19 = scmp.eq.s32.totalorder 0, 0
  // Predicated region
  $region18: #{densebackproj_forward.17} parent=0 // pred_check
    %p20 = pneg %p19
  $region19: #{densebackproj_forward.17} parent=0 // pred_check_branch
    %22 = sbr.rel (%p20) target = $region21
  $region20: #{densebackproj_forward.17} parent=0 // pred_region
    %23 = vst [vmem:[#allocation2] sm:$0xff] 0.0
    %24 = vst [vmem:[#allocation2 + $0x8] sm:$0xff] 0.0
    %25 = vst [vmem:[#allocation2 + $0x10] sm:$0xff] 0.0
    %26 = vst [vmem:[#allocation2 + $0x18] sm:$0xff] 0.0
  $region21: #{densebackproj_forward.17} parent=0 // pred_fallthru
    _
  %v27 = vld [vmem:[#allocation2] sm:$0xff]
  %v28 = vld [vmem:[#allocation2 + $0x8] sm:$0xff]
  %v29 = vld [vmem:[#allocation2 + $0x10] sm:$0xff]
  %v30 = vld [vmem:[#allocation2 + $0x18] sm:$0xff]
  %v31 = vld [vmem:[%s0] sm:$0xf]
  %v32 = vld [vmem:[%s0 + $0x4] sm:$0xf]
  %v33 = vld [vmem:[%s0 + $0x8] sm:$0xf]
  %v34 = vld [vmem:[%s0 + $0xc] sm:$0xf]
  %v35 = vld [vmem:[%s1] sm:$0xf]
  %v36 = vld [vmem:[%s1 + $0x4] sm:$0xf]
  %v37 = vld [vmem:[%s1 + $0x8] sm:$0xf]
  %v38 = vld [vmem:[%s1 + $0xc] sm:$0xf]
  %v39 = vld [vmem:[%s1 + $0x10] sm:$0xf]
  %v40 = vld [vmem:[%s1 + $0x14] sm:$0xf]
  %v41 = vld [vmem:[%s1 + $0x18] sm:$0xf]
  %v42 = vld [vmem:[%s1 + $0x1c] sm:$0xf]
  %v43 = vld [vmem:[%s1 + $0x20] sm:$0xf]
  %v48 = vunpack.c.l.b16 %v31
  %v49 = vunpack.c.l.b16 %v32
  %v50 = vunpack.c.l.b16 %v33
  %v51 = vunpack.c.l.b16 %v34
  %v52 = vpack.c.b16 %v49, %v48
  %v53 = vpack.c.b16 %v51, %v50
  %v63 = vunpack.c.l.b16 %v35
  %v64 = vunpack.c.l.b16 %v36
  %v65 = vunpack.c.l.b16 %v37
  %v66 = vunpack.c.l.b16 %v38
  %v67 = vunpack.c.l.b16 %v39
  %v68 = vunpack.c.l.b16 %v40
  %v69 = vunpack.c.l.b16 %v41
  %v70 = vunpack.c.l.b16 %v42
  %v71 = vunpack.c.l.b16 %v43
  %v72 = vpack.c.b16 %v64, %v63
  %v73 = vpack.c.b16 %v66, %v65
  %v74 = vpack.c.b16 %v68, %v67
  %v75 = vpack.c.b16 %v70, %v69
  %v76 = vpack.c.b16 %v71, %v71
  %vm81 = vcmask 588800
  %v83 = vsel %vm81, %v52, 0
  %v86 = vsel %vm81, %v53, 0
  %vm88 = vcmask 1043456
  %v90 = vsel %vm88, %v76, 0
  %92 = vmatprep.subr.bf16.mxu0 0
  %93 = vmatpush1.bf16.msra.mxu0 %v72
  %94 = vmatprep.subr.bf16.mxu0 0
  %95 = vmatpush1.bf16.msra.mxu0 %v73
  %96 = vmatprep.subr.bf16.mxu0 0
  %97 = vmatpush1.bf16.msra.mxu0 %v74
  %98 = vmatprep.subr.bf16.mxu0 0
  %99 = vmatpush1.bf16.msra.mxu0 %v75
  %100 = vmatprep.subr.bf16.mxu0 0
  %101 = vmatpush1.bf16.msra.mxu0 %v90
  %102 = vmatprep.subr.bf16.mxu0 0
  %103 = vmatpush1.bf16.msra.mxu0 0
  %104 = vmatprep.subr.bf16.mxu0 0
  %105 = vmatpush1.bf16.msra.mxu0 0
  %106 = vmatprep.subr.bf16.mxu0 0
  %107 = vmatpush1.bf16.msra.mxu0 0
  %108 = vmatprep.subr.bf16.mxu0 0
  %109 = vmatpush1.bf16.msra.mxu0 0
  %110 = vmatprep.subr.bf16.mxu0 0
  %111 = vmatpush1.bf16.msra.mxu0 0
  %112 = vmatprep.subr.bf16.mxu0 0
  %113 = vmatpush1.bf16.msra.mxu0 0
  %114 = vmatprep.subr.bf16.mxu0 0
  %115 = vmatpush1.bf16.msra.mxu0 0
  %116 = vmatprep.subr.bf16.mxu0 0
  %117 = vmatpush1.bf16.msra.mxu0 0
  %118 = vmatprep.subr.bf16.mxu0 0
  %119 = vmatpush1.bf16.msra.mxu0 0
  %120 = vmatprep.subr.bf16.mxu0 0
  %121 = vmatpush1.bf16.msra.mxu0 0
  %122 = vmatprep.subr.bf16.mxu0 0
  %123 = vmatpush1.bf16.msra.mxu0 0
  %124 = vmatprep.mubr.bf16.mxu0 0
  %125 = vmatmul.mubr.bf16.gmra.mrb[0].mxu0 %v83
  %v126 = vpop.f32.mrb[0].mxu0
  %v127 = vadd.f32 0.0, %v126
  %v128 = vpop.f32.mrb[0].mxu0
  %v129 = vpop.f32.mrb[0].mxu0
  %v130 = vadd.f32 0.0, %v129
  %v131 = vpop.f32.mrb[0].mxu0
  %132 = vmatprep.mubr.bf16.mxu0 0
  %133 = vmatmul.mubr.bf16.gmra.mrb[0].mxu0 %v86
  %v134 = vpop.f32.mrb[0].mxu0
  %v135 = vadd.f32 0.0, %v134
  %v136 = vpop.f32.mrb[0].mxu0
  %v137 = vpop.f32.mrb[0].mxu0
  %v138 = vadd.f32 0.0, %v137
  %v139 = vpop.f32.mrb[0].mxu0
  %140 = vdwg.mxu0
  %v141 = vadd.f32 %v27, %v127
  %v142 = vadd.f32 %v28, %v130
  %v143 = vadd.f32 %v29, %v135
  %v144 = vadd.f32 %v30, %v138
  %145 = vst [vmem:[#allocation2] sm:$0xff] %v141
  %146 = vst [vmem:[#allocation2 + $0x8] sm:$0xff] %v142
  %147 = vst [vmem:[#allocation2 + $0x10] sm:$0xff] %v143
  %148 = vst [vmem:[#allocation2 + $0x18] sm:$0xff] %v144
  // Predicated region
  $region22: #{densebackproj_forward.17} parent=0 // pred_check
    %p149 = pneg %p19
  $region23: #{densebackproj_forward.17} parent=0 // pred_check_branch
    %151 = sbr.rel (%p149) target = $region25
  $region24: #{densebackproj_forward.17} parent=0 // pred_region
    %v152 = vld [vmem:[#allocation2] sm:$0xff]
    %v153 = vld [vmem:[#allocation2 + $0x8] sm:$0xff]
    %v154 = vld [vmem:[#allocation2 + $0x10] sm:$0xff]
    %v155 = vld [vmem:[#allocation2 + $0x18] sm:$0xff]
    %v156 = vld [vmem:[%s2] sm:$0xff]
    %v157 = vld [vmem:[%s2 + $0x8] sm:$0xff]
    %v158 = vld [vmem:[%s2 + $0x10] sm:$0xff]
    %v159 = vld [vmem:[%s2 + $0x18] sm:$0xff]
    %161 = vset.pattern.permute.xlu0 0
    %162 = vperm.xlu0 %161, %v156
    %v163 = vpop.permute.xlu0 %162
    %166 = vset.pattern.permute.xlu0 0
    %167 = vperm.xlu0 %166, %v157
    %v168 = vpop.permute.xlu0 %167
    %171 = vset.pattern.permute.xlu0 0
    %172 = vperm.xlu0 %171, %v158
    %v173 = vpop.permute.xlu0 %172
    %176 = vset.pattern.permute.xlu0 0
    %177 = vperm.xlu0 %176, %v159
    %v178 = vpop.permute.xlu0 %177
    %v180 = vadd.f32 %v152, %v163
    %v181 = vadd.f32 %v153, %v168
    %v182 = vadd.f32 %v154, %v173
    %v183 = vadd.f32 %v155, %v178
    %s184 = sld [smem:[#allocation3]]
    %vm185 = vcmp.ge.f32.partialorder %v180, 0.0
    %vm186 = vcmp.ge.f32.partialorder %v181, 0.0
    %vm187 = vcmp.ge.f32.partialorder %v182, 0.0
    %vm188 = vcmp.ge.f32.partialorder %v183, 0.0
    %v189 = vstv %s184
    %v190 = vmul.f32 %v189, %v180
    %v191 = vmul.f32 %v189, %v181
    %v192 = vmul.f32 %v189, %v182
    %v193 = vmul.f32 %v189, %v183
    %v194 = vsel %vm185, %v180, %v190
    %v195 = vsel %vm186, %v181, %v191
    %v196 = vsel %vm187, %v182, %v192
    %v197 = vsel %vm188, %v183, %v193
    %v198 = vpack.c.bf16 %v195, %v194
    %v199 = vpack.c.bf16 %v197, %v196
    %v202 = vunpack.c.l.b16 %v198
    %v203 = vunpack.c.h.b16 %v198
    %v204 = vunpack.c.l.b16 %v199
    %v205 = vunpack.c.h.b16 %v199
    %v206 = vpack.c.b16 %v202, %v202
    %v207 = vpack.c.b16 %v203, %v203
    %v208 = vpack.c.b16 %v204, %v204
    %v209 = vpack.c.b16 %v205, %v205
    %214 = vst [vmem:[%s4] sm:$0xf] %v206
    %215 = vst [vmem:[%s4 + $0x4] sm:$0xf] %v207
    %216 = vst [vmem:[%s4 + $0x8] sm:$0xf] %v208
    %217 = vst [vmem:[%s4 + $0xc] sm:$0xf] %v209
  $region25: #{densebackproj_forward.17} parent=0 // pred_fallthru
    _
  // Predicated region
  $region26: #{densebackproj_forward.17} parent=0 // pred_check
    _
  $region27: #{densebackproj_forward.17} parent=0 // pred_check_branch
    %219 = sbr.rel (0) target = $region29
  $region28: #{densebackproj_forward.17} parent=0 // pred_region
    _
  $region29: #{densebackproj_forward.17} parent=0 // pred_fallthru
    _
  // Predicated region
  $region30: #{densebackproj_forward.17} parent=0 // pred_check
    _
  $region31: #{densebackproj_forward.17} parent=0 // pred_check_branch
    %221 = sbr.rel (0) target = $region33
  $region32: #{densebackproj_forward.17} parent=0 // pred_region
    _
  $region33: #{densebackproj_forward.17} parent=0 // pred_fallthru
    _

// kernel: densebackproj_forward.19
$region0: #{densebackproj_forward.19}
  #allocation0 [shape = 'u32[]', space=smem, size = 0x4, offset = 0x4, fixed_abs, tag = 'smem constant byte address 0x4 - core index']
  #allocation1 [shape = 'u32[144,128]{1,0:T(1,128)}', space=vmem, size = 0x12000, scoped, tag = 'internal scratch']
  #allocation2 [shape = 'f32[32,128]{1,0:T(8,128)}', space=vmem, size = 0x4000, scoped, tag = 'scratch operand']
  #allocation3 [shape = 'f32[1]{0:T(128)S(6)}', space=smem, size = 0x200, scoped, tag = 'scoped memory for densebackproj_forward.19']
  %s0 = inlined_call_operand.vmem [shape: bf16[32,72], index: 0, kind: input, shape index: {}]
  %s1 = inlined_call_operand.vmem [shape: bf16[72,128], index: 1, kind: input, shape index: {}]
  %s2 = inlined_call_operand.vmem [shape: f32[32,1], index: 2, kind: input, shape index: {}]
  %s3 = inlined_call_operand.<no memory space> [shape: f32[1], index: 3, kind: input, shape index: {}]
  %s4 = inlined_call_operand.vmem [shape: bf16[32,128], index: 4, kind: input, shape index: {}]
  %s5 = inlined_call_operand.vmem [shape: bf16[32,128], index: 5, kind: output, shape index: {}]
  %s6 = sld [smem:[#allocation0]]
  $region38: #{densebackproj_forward.19} parent=0
    _
  %s8 = ssub.s32 1, %s6
  %s9 = scalar_select 0, %s8, %s6
  %10 = sst [smem:[#allocation3]] %s3
  // Predicated region
  $region2: #{densebackproj_forward.19} parent=0 // pred_check
    _
  $region3: #{densebackproj_forward.19} parent=0 // pred_check_branch
    %12 = sbr.rel (0) target = $region5
  $region4: #{densebackproj_forward.19} parent=0 // pred_region
    _
  $region5: #{densebackproj_forward.19} parent=0 // pred_fallthru
    _
  // Predicated region
  $region6: #{densebackproj_forward.19} parent=0 // pred_check
    _
  $region7: #{densebackproj_forward.19} parent=0 // pred_check_branch
    %14 = sbr.rel (0) target = $region9
  $region8: #{densebackproj_forward.19} parent=0 // pred_region
    _
  $region9: #{densebackproj_forward.19} parent=0 // pred_fallthru
    _
  // Predicated region
  $region10: #{densebackproj_forward.19} parent=0 // pred_check
    _
  $region11: #{densebackproj_forward.19} parent=0 // pred_check_branch
    %16 = sbr.rel (0) target = $region13
  $region12: #{densebackproj_forward.19} parent=0 // pred_region
    _
  $region13: #{densebackproj_forward.19} parent=0 // pred_fallthru
    _
  // Predicated region
  $region14: #{densebackproj_forward.19} parent=0 // pred_check
    _
  $region15: #{densebackproj_forward.19} parent=0 // pred_check_branch
    %18 = sbr.rel (0) target = $region17
  $region16: #{densebackproj_forward.19} parent=0 // pred_region
    _
  $region17: #{densebackproj_forward.19} parent=0 // pred_fallthru
    _
  // Predicated region
  $region18: #{densebackproj_forward.19} parent=0 // pred_check
    _
  $region19: #{densebackproj_forward.19} parent=0 // pred_check_branch
    %20 = sbr.rel (0) target = $region21
  $region20: #{densebackproj_forward.19} parent=0 // pred_region
    _
  $region21: #{densebackproj_forward.19} parent=0 // pred_fallthru
    _
  %p22 = scmp.eq.s32.totalorder 0, 0
  // Predicated region
  $region22: #{densebackproj_forward.19} parent=0 // pred_check
    %p23 = pneg %p22
  $region23: #{densebackproj_forward.19} parent=0 // pred_check_branch
    %25 = sbr.rel (%p23) target = $region25
  $region24: #{densebackproj_forward.19} parent=0 // pred_region
    %26 = vst [vmem:[#allocation2] sm:$0xff] 0.0
    %27 = vst [vmem:[#allocation2 + $0x8] sm:$0xff] 0.0
    %28 = vst [vmem:[#allocation2 + $0x10] sm:$0xff] 0.0
    %29 = vst [vmem:[#allocation2 + $0x18] sm:$0xff] 0.0
  $region25: #{densebackproj_forward.19} parent=0 // pred_fallthru
    _
  %v30 = vld [vmem:[#allocation2] sm:$0xff]
  %v31 = vld [vmem:[#allocation2 + $0x8] sm:$0xff]
  %v32 = vld [vmem:[#allocation2 + $0x10] sm:$0xff]
  %v33 = vld [vmem:[#allocation2 + $0x18] sm:$0xff]
  %v34 = vld [vmem:[%s0] sm:$0xf]
  %v35 = vld [vmem:[%s0 + $0x4] sm:$0xf]
  %v36 = vld [vmem:[%s0 + $0x8] sm:$0xf]
  %v37 = vld [vmem:[%s0 + $0xc] sm:$0xf]
  %v38 = vld [vmem:[%s1] sm:$0xf]
  %v39 = vld [vmem:[%s1 + $0x4] sm:$0xf]
  %v40 = vld [vmem:[%s1 + $0x8] sm:$0xf]
  %v41 = vld [vmem:[%s1 + $0xc] sm:$0xf]
  %v42 = vld [vmem:[%s1 + $0x10] sm:$0xf]
  %v43 = vld [vmem:[%s1 + $0x14] sm:$0xf]
  %v44 = vld [vmem:[%s1 + $0x18] sm:$0xf]
  %v45 = vld [vmem:[%s1 + $0x1c] sm:$0xf]
  %v46 = vld [vmem:[%s1 + $0x20] sm:$0xf]
  %v51 = vunpack.c.l.b16 %v34
  %v52 = vunpack.c.l.b16 %v35
  %v53 = vunpack.c.l.b16 %v36
  %v54 = vunpack.c.l.b16 %v37
  %v55 = vpack.c.b16 %v52, %v51
  %v56 = vpack.c.b16 %v54, %v53
  %v66 = vunpack.c.l.b16 %v38
  %v67 = vunpack.c.l.b16 %v39
  %v68 = vunpack.c.l.b16 %v40
  %v69 = vunpack.c.l.b16 %v41
  %v70 = vunpack.c.l.b16 %v42
  %v71 = vunpack.c.l.b16 %v43
  %v72 = vunpack.c.l.b16 %v44
  %v73 = vunpack.c.l.b16 %v45
  %v74 = vunpack.c.l.b16 %v46
  %v75 = vpack.c.b16 %v67, %v66
  %v76 = vpack.c.b16 %v69, %v68
  %v77 = vpack.c.b16 %v71, %v70
  %v78 = vpack.c.b16 %v73, %v72
  %v79 = vpack.c.b16 %v74, %v74
  %vm84 = vcmask 588800
  %v86 = vsel %vm84, %v55, 0
  %v89 = vsel %vm84, %v56, 0
  %vm91 = vcmask 1043456
  %v93 = vsel %vm91, %v79, 0
  %95 = vmatprep.subr.bf16.mxu0 0
  %96 = vmatpush1.bf16.msra.mxu0 %v75
  %97 = vmatprep.subr.bf16.mxu0 0
  %98 = vmatpush1.bf16.msra.mxu0 %v76
  %99 = vmatprep.subr.bf16.mxu0 0
  %100 = vmatpush1.bf16.msra.mxu0 %v77
  %101 = vmatprep.subr.bf16.mxu0 0
  %102 = vmatpush1.bf16.msra.mxu0 %v78
  %103 = vmatprep.subr.bf16.mxu0 0
  %104 = vmatpush1.bf16.msra.mxu0 %v93
  %105 = vmatprep.subr.bf16.mxu0 0
  %106 = vmatpush1.bf16.msra.mxu0 0
  %107 = vmatprep.subr.bf16.mxu0 0
  %108 = vmatpush1.bf16.msra.mxu0 0
  %109 = vmatprep.subr.bf16.mxu0 0
  %110 = vmatpush1.bf16.msra.mxu0 0
  %111 = vmatprep.subr.bf16.mxu0 0
  %112 = vmatpush1.bf16.msra.mxu0 0
  %113 = vmatprep.subr.bf16.mxu0 0
  %114 = vmatpush1.bf16.msra.mxu0 0
  %115 = vmatprep.subr.bf16.mxu0 0
  %116 = vmatpush1.bf16.msra.mxu0 0
  %117 = vmatprep.subr.bf16.mxu0 0
  %118 = vmatpush1.bf16.msra.mxu0 0
  %119 = vmatprep.subr.bf16.mxu0 0
  %120 = vmatpush1.bf16.msra.mxu0 0
  %121 = vmatprep.subr.bf16.mxu0 0
  %122 = vmatpush1.bf16.msra.mxu0 0
  %123 = vmatprep.subr.bf16.mxu0 0
  %124 = vmatpush1.bf16.msra.mxu0 0
  %125 = vmatprep.subr.bf16.mxu0 0
  %126 = vmatpush1.bf16.msra.mxu0 0
  %127 = vmatprep.mubr.bf16.mxu0 0
  %128 = vmatmul.mubr.bf16.gmra.mrb[0].mxu0 %v86
  %v129 = vpop.f32.mrb[0].mxu0
  %v130 = vadd.f32 0.0, %v129
  %v131 = vpop.f32.mrb[0].mxu0
  %v132 = vpop.f32.mrb[0].mxu0
  %v133 = vadd.f32 0.0, %v132
  %v134 = vpop.f32.mrb[0].mxu0
  %135 = vmatprep.mubr.bf16.mxu0 0
  %136 = vmatmul.mubr.bf16.gmra.mrb[0].mxu0 %v89
  %v137 = vpop.f32.mrb[0].mxu0
  %v138 = vadd.f32 0.0, %v137
  %v139 = vpop.f32.mrb[0].mxu0
  %v140 = vpop.f32.mrb[0].mxu0
  %v141 = vadd.f32 0.0, %v140
  %v142 = vpop.f32.mrb[0].mxu0
  %143 = vdwg.mxu0
  %v144 = vadd.f32 %v30, %v130
  %v145 = vadd.f32 %v31, %v133
  %v146 = vadd.f32 %v32, %v138
  %v147 = vadd.f32 %v33, %v141
  %148 = vst [vmem:[#allocation2] sm:$0xff] %v144
  %149 = vst [vmem:[#allocation2 + $0x8] sm:$0xff] %v145
  %150 = vst [vmem:[#allocation2 + $0x10] sm:$0xff] %v146
  %151 = vst [vmem:[#allocation2 + $0x18] sm:$0xff] %v147
  // Predicated region
  $region26: #{densebackproj_forward.19} parent=0 // pred_check
    %p152 = pneg %p22
  $region27: #{densebackproj_forward.19} parent=0 // pred_check_branch
    %154 = sbr.rel (%p152) target = $region29
  $region28: #{densebackproj_forward.19} parent=0 // pred_region
    %v155 = vld [vmem:[#allocation2] sm:$0xff]
    %v156 = vld [vmem:[#allocation2 + $0x8] sm:$0xff]
    %v157 = vld [vmem:[#allocation2 + $0x10] sm:$0xff]
    %v158 = vld [vmem:[#allocation2 + $0x18] sm:$0xff]
    %v159 = vld [vmem:[%s2] sm:$0xff]
    %v160 = vld [vmem:[%s2 + $0x8] sm:$0xff]
    %v161 = vld [vmem:[%s2 + $0x10] sm:$0xff]
    %v162 = vld [vmem:[%s2 + $0x18] sm:$0xff]
    %164 = vset.pattern.permute.xlu0 0
    %165 = vperm.xlu0 %164, %v159
    %v166 = vpop.permute.xlu0 %165
    %169 = vset.pattern.permute.xlu0 0
    %170 = vperm.xlu0 %169, %v160
    %v171 = vpop.permute.xlu0 %170
    %174 = vset.pattern.permute.xlu0 0
    %175 = vperm.xlu0 %174, %v161
    %v176 = vpop.permute.xlu0 %175
    %179 = vset.pattern.permute.xlu0 0
    %180 = vperm.xlu0 %179, %v162
    %v181 = vpop.permute.xlu0 %180
    %v183 = vadd.f32 %v155, %v166
    %v184 = vadd.f32 %v156, %v171
    %v185 = vadd.f32 %v157, %v176
    %v186 = vadd.f32 %v158, %v181
    %s187 = sld [smem:[#allocation3]]
    %vm188 = vcmp.ge.f32.partialorder %v183, 0.0
    %vm189 = vcmp.ge.f32.partialorder %v184, 0.0
    %vm190 = vcmp.ge.f32.partialorder %v185, 0.0
    %vm191 = vcmp.ge.f32.partialorder %v186, 0.0
    %v192 = vstv %s187
    %v193 = vmul.f32 %v192, %v183
    %v194 = vmul.f32 %v192, %v184
    %v195 = vmul.f32 %v192, %v185
    %v196 = vmul.f32 %v192, %v186
    %v197 = vsel %vm188, %v183, %v193
    %v198 = vsel %vm189, %v184, %v194
    %v199 = vsel %vm190, %v185, %v195
    %v200 = vsel %vm191, %v186, %v196
    %v201 = vld [vmem:[%s4] sm:$0xf]
    %v202 = vld [vmem:[%s4 + $0x4] sm:$0xf]
    %v203 = vld [vmem:[%s4 + $0x8] sm:$0xf]
    %v204 = vld [vmem:[%s4 + $0xc] sm:$0xf]
    %v205 = vunpack.c.l.bf16 %v201
    %v206 = vunpack.c.l.bf16 %v202
    %v207 = vunpack.c.l.bf16 %v203
    %v208 = vunpack.c.l.bf16 %v204
    %v209 = vadd.f32 %v197, %v205
    %v210 = vadd.f32 %v198, %v206
    %v211 = vadd.f32 %v199, %v207
    %v212 = vadd.f32 %v200, %v208
    %v213 = vpack.c.bf16 %v210, %v209
    %v214 = vpack.c.bf16 %v212, %v211
    %v217 = vunpack.c.l.b16 %v213
    %v218 = vunpack.c.h.b16 %v213
    %v219 = vunpack.c.l.b16 %v214
    %v220 = vunpack.c.h.b16 %v214
    %v221 = vpack.c.b16 %v217, %v217
    %v222 = vpack.c.b16 %v218, %v218
    %v223 = vpack.c.b16 %v219, %v219
    %v224 = vpack.c.b16 %v220, %v220
    %229 = vst [vmem:[%s5] sm:$0xf] %v221
    %230 = vst [vmem:[%s5 + $0x4] sm:$0xf] %v222
    %231 = vst [vmem:[%s5 + $0x8] sm:$0xf] %v223
    %232 = vst [vmem:[%s5 + $0xc] sm:$0xf] %v224
  $region29: #{densebackproj_forward.19} parent=0 // pred_fallthru
    _
  // Predicated region
  $region30: #{densebackproj_forward.19} parent=0 // pred_check
    _
  $region31: #{densebackproj_forward.19} parent=0 // pred_check_branch
    %234 = sbr.rel (0) target = $region33
  $region32: #{densebackproj_forward.19} parent=0 // pred_region
    _
  $region33: #{densebackproj_forward.19} parent=0 // pred_fallthru
    _
  // Predicated region
  $region34: #{densebackproj_forward.19} parent=0 // pred_check
    _
  $region35: #{densebackproj_forward.19} parent=0 // pred_check_branch
    %236 = sbr.rel (0) target = $region37
  $region36: #{densebackproj_forward.19} parent=0 // pred_region
    _
  $region37: #{densebackproj_forward.19} parent=0 // pred_fallthru
    _

// kernel: densebackproj_forward.18
$region0: #{densebackproj_forward.18}
  #allocation0 [shape = 'u32[]', space=smem, size = 0x4, offset = 0x4, fixed_abs, tag = 'smem constant byte address 0x4 - core index']
  #allocation1 [shape = 'u32[144,128]{1,0:T(1,128)}', space=vmem, size = 0x12000, scoped, tag = 'internal scratch']
  #allocation2 [shape = 'f32[8,128]{1,0:T(8,128)}', space=vmem, size = 0x1000, scoped, tag = 'scratch operand']
  #allocation3 [shape = 'f32[1]{0:T(128)S(6)}', space=smem, size = 0x200, scoped, tag = 'scoped memory for densebackproj_forward.18']
  %s0 = inlined_call_operand.vmem [shape: bf16[8,288], index: 0, kind: input, shape index: {}]
  %s1 = inlined_call_operand.vmem [shape: bf16[288,128], index: 1, kind: input, shape index: {}]
  %s2 = inlined_call_operand.vmem [shape: f32[8,1], index: 2, kind: input, shape index: {}]
  %s3 = inlined_call_operand.<no memory space> [shape: f32[1], index: 3, kind: input, shape index: {}]
  %s4 = inlined_call_operand.vmem [shape: bf16[8,128], index: 4, kind: input, shape index: {}]
  %s5 = inlined_call_operand.vmem [shape: bf16[8,128], index: 5, kind: output, shape index: {}]
  %s6 = sld [smem:[#allocation0]]
  $region38: #{densebackproj_forward.18} parent=0
    _
  %s8 = ssub.s32 1, %s6
  %s9 = scalar_select 0, %s8, %s6
  %10 = sst [smem:[#allocation3]] %s3
  // Predicated region
  $region2: #{densebackproj_forward.18} parent=0 // pred_check
    _
  $region3: #{densebackproj_forward.18} parent=0 // pred_check_branch
    %12 = sbr.rel (0) target = $region5
  $region4: #{densebackproj_forward.18} parent=0 // pred_region
    _
  $region5: #{densebackproj_forward.18} parent=0 // pred_fallthru
    _
  // Predicated region
  $region6: #{densebackproj_forward.18} parent=0 // pred_check
    _
  $region7: #{densebackproj_forward.18} parent=0 // pred_check_branch
    %14 = sbr.rel (0) target = $region9
  $region8: #{densebackproj_forward.18} parent=0 // pred_region
    _
  $region9: #{densebackproj_forward.18} parent=0 // pred_fallthru
    _
  // Predicated region
  $region10: #{densebackproj_forward.18} parent=0 // pred_check
    _
  $region11: #{densebackproj_forward.18} parent=0 // pred_check_branch
    %16 = sbr.rel (0) target = $region13
  $region12: #{densebackproj_forward.18} parent=0 // pred_region
    _
  $region13: #{densebackproj_forward.18} parent=0 // pred_fallthru
    _
  // Predicated region
  $region14: #{densebackproj_forward.18} parent=0 // pred_check
    _
  $region15: #{densebackproj_forward.18} parent=0 // pred_check_branch
    %18 = sbr.rel (0) target = $region17
  $region16: #{densebackproj_forward.18} parent=0 // pred_region
    _
  $region17: #{densebackproj_forward.18} parent=0 // pred_fallthru
    _
  // Predicated region
  $region18: #{densebackproj_forward.18} parent=0 // pred_check
    _
  $region19: #{densebackproj_forward.18} parent=0 // pred_check_branch
    %20 = sbr.rel (0) target = $region21
  $region20: #{densebackproj_forward.18} parent=0 // pred_region
    _
  $region21: #{densebackproj_forward.18} parent=0 // pred_fallthru
    _
  %p22 = scmp.eq.s32.totalorder 0, 0
  // Predicated region
  $region22: #{densebackproj_forward.18} parent=0 // pred_check
    %p23 = pneg %p22
  $region23: #{densebackproj_forward.18} parent=0 // pred_check_branch
    %25 = sbr.rel (%p23) target = $region25
  $region24: #{densebackproj_forward.18} parent=0 // pred_region
    %26 = vst [vmem:[#allocation2] sm:$0xff] 0.0
  $region25: #{densebackproj_forward.18} parent=0 // pred_fallthru
    _
  %v27 = vld [vmem:[#allocation2] sm:$0xff]
  %v28 = vld [vmem:[%s0] sm:$0xff]
  %v29 = vld [vmem:[%s0 + $0x8] sm:$0xf]
  %v30 = vld [vmem:[%s1] sm:$0xf]
  %v31 = vld [vmem:[%s1 + $0x4] sm:$0xf]
  %v32 = vld [vmem:[%s1 + $0x8] sm:$0xf]
  %v33 = vld [vmem:[%s1 + $0xc] sm:$0xf]
  %v34 = vld [vmem:[%s1 + $0x10] sm:$0xf]
  %v35 = vld [vmem:[%s1 + $0x14] sm:$0xf]
  %v36 = vld [vmem:[%s1 + $0x18] sm:$0xf]
  %v37 = vld [vmem:[%s1 + $0x1c] sm:$0xf]
  %v38 = vld [vmem:[%s1 + $0x20] sm:$0xf]
  %v39 = vld [vmem:[%s1 + $0x24] sm:$0xf]
  %v40 = vld [vmem:[%s1 + $0x28] sm:$0xf]
  %v41 = vld [vmem:[%s1 + $0x2c] sm:$0xf]
  %v42 = vld [vmem:[%s1 + $0x30] sm:$0xf]
  %v43 = vld [vmem:[%s1 + $0x34] sm:$0xf]
  %v44 = vld [vmem:[%s1 + $0x38] sm:$0xf]
  %v45 = vld [vmem:[%s1 + $0x3c] sm:$0xf]
  %v46 = vld [vmem:[%s1 + $0x40] sm:$0xf]
  %v47 = vld [vmem:[%s1 + $0x44] sm:$0xf]
  %v48 = vld [vmem:[%s1 + $0x48] sm:$0xf]
  %v49 = vld [vmem:[%s1 + $0x4c] sm:$0xf]
  %v50 = vld [vmem:[%s1 + $0x50] sm:$0xf]
  %v51 = vld [vmem:[%s1 + $0x54] sm:$0xf]
  %v52 = vld [vmem:[%s1 + $0x58] sm:$0xf]
  %v53 = vld [vmem:[%s1 + $0x5c] sm:$0xf]
  %v54 = vld [vmem:[%s1 + $0x60] sm:$0xf]
  %v55 = vld [vmem:[%s1 + $0x64] sm:$0xf]
  %v56 = vld [vmem:[%s1 + $0x68] sm:$0xf]
  %v57 = vld [vmem:[%s1 + $0x6c] sm:$0xf]
  %v58 = vld [vmem:[%s1 + $0x70] sm:$0xf]
  %v59 = vld [vmem:[%s1 + $0x74] sm:$0xf]
  %v60 = vld [vmem:[%s1 + $0x78] sm:$0xf]
  %v61 = vld [vmem:[%s1 + $0x7c] sm:$0xf]
  %v62 = vld [vmem:[%s1 + $0x80] sm:$0xf]
  %v63 = vld [vmem:[%s1 + $0x84] sm:$0xf]
  %v64 = vld [vmem:[%s1 + $0x88] sm:$0xf]
  %v65 = vld [vmem:[%s1 + $0x8c] sm:$0xf]
  %v68 = vunpack.c.l.b16 %v28
  %v69 = vunpack.c.h.b16 %v28
  %v70 = vunpack.c.l.b16 %v29
  %v71 = vpack.c.b16 %v68, %v68
  %v72 = vpack.c.b16 %v69, %v69
  %v73 = vpack.c.b16 %v70, %v70
  %v112 = vunpack.c.l.b16 %v30
  %v113 = vunpack.c.l.b16 %v31
  %v114 = vunpack.c.l.b16 %v32
  %v115 = vunpack.c.l.b16 %v33
  %v116 = vunpack.c.l.b16 %v34
  %v117 = vunpack.c.l.b16 %v35
  %v118 = vunpack.c.l.b16 %v36
  %v119 = vunpack.c.l.b16 %v37
  %v120 = vunpack.c.l.b16 %v38
  %v121 = vunpack.c.l.b16 %v39
  %v122 = vunpack.c.l.b16 %v40
  %v123 = vunpack.c.l.b16 %v41
  %v124 = vunpack.c.l.b16 %v42
  %v125 = vunpack.c.l.b16 %v43
  %v126 = vunpack.c.l.b16 %v44
  %v127 = vunpack.c.l.b16 %v45
  %v128 = vunpack.c.l.b16 %v46
  %v129 = vunpack.c.l.b16 %v47
  %v130 = vunpack.c.l.b16 %v48
  %v131 = vunpack.c.l.b16 %v49
  %v132 = vunpack.c.l.b16 %v50
  %v133 = vunpack.c.l.b16 %v51
  %v134 = vunpack.c.l.b16 %v52
  %v135 = vunpack.c.l.b16 %v53
  %v136 = vunpack.c.l.b16 %v54
  %v137 = vunpack.c.l.b16 %v55
  %v138 = vunpack.c.l.b16 %v56
  %v139 = vunpack.c.l.b16 %v57
  %v140 = vunpack.c.l.b16 %v58
  %v141 = vunpack.c.l.b16 %v59
  %v142 = vunpack.c.l.b16 %v60
  %v143 = vunpack.c.l.b16 %v61
  %v144 = vunpack.c.l.b16 %v62
  %v145 = vunpack.c.l.b16 %v63
  %v146 = vunpack.c.l.b16 %v64
  %v147 = vunpack.c.l.b16 %v65
  %v148 = vpack.c.b16 %v113, %v112
  %v149 = vpack.c.b16 %v115, %v114
  %v150 = vpack.c.b16 %v117, %v116
  %v151 = vpack.c.b16 %v119, %v118
  %v152 = vpack.c.b16 %v121, %v120
  %v153 = vpack.c.b16 %v123, %v122
  %v154 = vpack.c.b16 %v125, %v124
  %v155 = vpack.c.b16 %v127, %v126
  %v156 = vpack.c.b16 %v129, %v128
  %v157 = vpack.c.b16 %v131, %v130
  %v158 = vpack.c.b16 %v133, %v132
  %v159 = vpack.c.b16 %v135, %v134
  %v160 = vpack.c.b16 %v137, %v136
  %v161 = vpack.c.b16 %v139, %v138
  %v162 = vpack.c.b16 %v141, %v140
  %v163 = vpack.c.b16 %v143, %v142
  %v164 = vpack.c.b16 %v145, %v144
  %v165 = vpack.c.b16 %v147, %v146
  %vm184 = vcmask 261120
  %v186 = vsel %vm184, %v73, 0
  %188 = vmatprep.subr.bf16.mxu0 0
  %189 = vmatpush1.bf16.msra.mxu0 %v148
  %190 = vmatprep.subr.bf16.mxu0 0
  %191 = vmatpush1.bf16.msra.mxu0 %v149
  %192 = vmatprep.subr.bf16.mxu0 0
  %193 = vmatpush1.bf16.msra.mxu0 %v150
  %194 = vmatprep.subr.bf16.mxu0 0
  %195 = vmatpush1.bf16.msra.mxu0 %v151
  %196 = vmatprep.subr.bf16.mxu0 0
  %197 = vmatpush1.bf16.msra.mxu0 %v152
  %198 = vmatprep.subr.bf16.mxu0 0
  %199 = vmatpush1.bf16.msra.mxu0 %v153
  %200 = vmatprep.subr.bf16.mxu0 0
  %201 = vmatpush1.bf16.msra.mxu0 %v154
  %202 = vmatprep.subr.bf16.mxu0 0
  %203 = vmatpush1.bf16.msra.mxu0 %v155
  %204 = vmatprep.subr.bf16.mxu0 0
  %205 = vmatpush1.bf16.msra.mxu0 %v156
  %206 = vmatprep.subr.bf16.mxu0 0
  %207 = vmatpush1.bf16.msra.mxu0 %v157
  %208 = vmatprep.subr.bf16.mxu0 0
  %209 = vmatpush1.bf16.msra.mxu0 %v158
  %210 = vmatprep.subr.bf16.mxu0 0
  %211 = vmatpush1.bf16.msra.mxu0 %v159
  %212 = vmatprep.subr.bf16.mxu0 0
  %213 = vmatpush1.bf16.msra.mxu0 %v160
  %214 = vmatprep.subr.bf16.mxu0 0
  %215 = vmatpush1.bf16.msra.mxu0 %v161
  %216 = vmatprep.subr.bf16.mxu0 0
  %217 = vmatpush1.bf16.msra.mxu0 %v162
  %218 = vmatprep.subr.bf16.mxu0 0
  %219 = vmatpush1.bf16.msra.mxu0 %v163
  %220 = vmatprep.mubr.bf16.mxu0 %v72
  %221 = vmatmul.mubr.bf16.gmra.mrb[0].mxu0 %v71
  %v222 = vpop.f32.mrb[0].mxu0
  %v223 = vadd.f32 0.0, %v222
  %v224 = vpop.f32.mrb[0].mxu0
  %v225 = vpop.f32.mrb[0].mxu0
  %v226 = vpop.f32.mrb[0].mxu0
  %227 = vdwg.mxu0
  %228 = vmatprep.subr.bf16.mxu0 0
  %229 = vmatpush1.bf16.msra.mxu0 %v164
  %230 = vmatprep.subr.bf16.mxu0 0
  %231 = vmatpush1.bf16.msra.mxu0 %v165
  %232 = vmatprep.subr.bf16.mxu0 0
  %233 = vmatpush1.bf16.msra.mxu0 0
  %234 = vmatprep.subr.bf16.mxu0 0
  %235 = vmatpush1.bf16.msra.mxu0 0
  %236 = vmatprep.subr.bf16.mxu0 0
  %237 = vmatpush1.bf16.msra.mxu0 0
  %238 = vmatprep.subr.bf16.mxu0 0
  %239 = vmatpush1.bf16.msra.mxu0 0
  %240 = vmatprep.subr.bf16.mxu0 0
  %241 = vmatpush1.bf16.msra.mxu0 0
  %242 = vmatprep.subr.bf16.mxu0 0
  %243 = vmatpush1.bf16.msra.mxu0 0
  %244 = vmatprep.subr.bf16.mxu0 0
  %245 = vmatpush1.bf16.msra.mxu0 0
  %246 = vmatprep.subr.bf16.mxu0 0
  %247 = vmatpush1.bf16.msra.mxu0 0
  %248 = vmatprep.subr.bf16.mxu0 0
  %249 = vmatpush1.bf16.msra.mxu0 0
  %250 = vmatprep.subr.bf16.mxu0 0
  %251 = vmatpush1.bf16.msra.mxu0 0
  %252 = vmatprep.subr.bf16.mxu0 0
  %253 = vmatpush1.bf16.msra.mxu0 0
  %254 = vmatprep.subr.bf16.mxu0 0
  %255 = vmatpush1.bf16.msra.mxu0 0
  %256 = vmatprep.subr.bf16.mxu0 0
  %257 = vmatpush1.bf16.msra.mxu0 0
  %258 = vmatprep.subr.bf16.mxu0 0
  %259 = vmatpush1.bf16.msra.mxu0 0
  %260 = vmatprep.mubr.bf16.mxu0 0
  %261 = vmatmul.mubr.bf16.gmra.mrb[0].mxu0 %v186
  %v262 = vpop.f32.mrb[0].mxu0
  %v263 = vadd.f32 %v223, %v262
  %v264 = vpop.f32.mrb[0].mxu0
  %v265 = vpop.f32.mrb[0].mxu0
  %v266 = vpop.f32.mrb[0].mxu0
  %267 = vdwg.mxu0
  %v268 = vadd.f32 %v27, %v263
  %269 = vst [vmem:[#allocation2] sm:$0xff] %v268
  // Predicated region
  $region26: #{densebackproj_forward.18} parent=0 // pred_check
    %p270 = pneg %p22
  $region27: #{densebackproj_forward.18} parent=0 // pred_check_branch
    %272 = sbr.rel (%p270) target = $region29
  $region28: #{densebackproj_forward.18} parent=0 // pred_region
    %v273 = vld [vmem:[#allocation2] sm:$0xff]
    %v274 = vld [vmem:[%s2] sm:$0xff]
    %276 = vset.pattern.permute.xlu0 0
    %277 = vperm.xlu0 %276, %v274
    %v278 = vpop.permute.xlu0 %277
    %v280 = vadd.f32 %v273, %v278
    %s281 = sld [smem:[#allocation3]]
    %vm282 = vcmp.ge.f32.partialorder %v280, 0.0
    %v283 = vstv %s281
    %v284 = vmul.f32 %v283, %v280
    %v285 = vsel %vm282, %v280, %v284
    %v286 = vld [vmem:[%s4] sm:$0xf]
    %v287 = vunpack.c.l.bf16 %v286
    %v288 = vsub.f32 %v285, %v287
    %v289 = vpack.c.bf16 %v288, %v288
    %290 = vst [vmem:[%s5] sm:$0xf] %v289
  $region29: #{densebackproj_forward.18} parent=0 // pred_fallthru
    _
  // Predicated region
  $region30: #{densebackproj_forward.18} parent=0 // pred_check
    _
  $region31: #{densebackproj_forward.18} parent=0 // pred_check_branch
    %292 = sbr.rel (0) target = $region33
  $region32: #{densebackproj_forward.18} parent=0 // pred_region
    _
  $region33: #{densebackproj_forward.18} parent=0 // pred_fallthru
    _
  // Predicated region
  $region34: #{densebackproj_forward.18} parent=0 // pred_check
    _
  $region35: #{densebackproj_forward.18} parent=0 // pred_check_branch
    %294 = sbr.rel (0) target = $region37
  $region36: #{densebackproj_forward.18} parent=0 // pred_region
    _
  $region37: #{densebackproj_forward.18} parent=0 // pred_fallthru
    _

// kernel: densebackproj_forward.20
$region0: #{densebackproj_forward.20}
  #allocation0 [shape = 'u32[]', space=smem, size = 0x4, offset = 0x4, fixed_abs, tag = 'smem constant byte address 0x4 - core index']
  #allocation1 [shape = 'u32[144,128]{1,0:T(1,128)}', space=vmem, size = 0x12000, scoped, tag = 'internal scratch']
  #allocation2 [shape = 'f32[8,128]{1,0:T(8,128)}', space=vmem, size = 0x1000, scoped, tag = 'scratch operand']
  #allocation3 [shape = 'f32[1]{0:T(128)S(6)}', space=smem, size = 0x200, scoped, tag = 'scoped memory for densebackproj_forward.20']
  %s0 = inlined_call_operand.vmem [shape: bf16[8,288], index: 0, kind: input, shape index: {}]
  %s1 = inlined_call_operand.vmem [shape: bf16[288,128], index: 1, kind: input, shape index: {}]
  %s2 = inlined_call_operand.vmem [shape: f32[8,1], index: 2, kind: input, shape index: {}]
  %s3 = inlined_call_operand.<no memory space> [shape: f32[1], index: 3, kind: input, shape index: {}]
  %s4 = inlined_call_operand.vmem [shape: bf16[8,128], index: 4, kind: output, shape index: {}]
  %s5 = sld [smem:[#allocation0]]
  $region34: #{densebackproj_forward.20} parent=0
    _
  %s7 = ssub.s32 1, %s5
  %s8 = scalar_select 0, %s7, %s5
  %9 = sst [smem:[#allocation3]] %s3
  // Predicated region
  $region2: #{densebackproj_forward.20} parent=0 // pred_check
    _
  $region3: #{densebackproj_forward.20} parent=0 // pred_check_branch
    %11 = sbr.rel (0) target = $region5
  $region4: #{densebackproj_forward.20} parent=0 // pred_region
    _
  $region5: #{densebackproj_forward.20} parent=0 // pred_fallthru
    _
  // Predicated region
  $region6: #{densebackproj_forward.20} parent=0 // pred_check
    _
  $region7: #{densebackproj_forward.20} parent=0 // pred_check_branch
    %13 = sbr.rel (0) target = $region9
  $region8: #{densebackproj_forward.20} parent=0 // pred_region
    _
  $region9: #{densebackproj_forward.20} parent=0 // pred_fallthru
    _
  // Predicated region
  $region10: #{densebackproj_forward.20} parent=0 // pred_check
    _
  $region11: #{densebackproj_forward.20} parent=0 // pred_check_branch
    %15 = sbr.rel (0) target = $region13
  $region12: #{densebackproj_forward.20} parent=0 // pred_region
    _
  $region13: #{densebackproj_forward.20} parent=0 // pred_fallthru
    _
  // Predicated region
  $region14: #{densebackproj_forward.20} parent=0 // pred_check
    _
  $region15: #{densebackproj_forward.20} parent=0 // pred_check_branch
    %17 = sbr.rel (0) target = $region17
  $region16: #{densebackproj_forward.20} parent=0 // pred_region
    _
  $region17: #{densebackproj_forward.20} parent=0 // pred_fallthru
    _
  %p19 = scmp.eq.s32.totalorder 0, 0
  // Predicated region
  $region18: #{densebackproj_forward.20} parent=0 // pred_check
    %p20 = pneg %p19
  $region19: #{densebackproj_forward.20} parent=0 // pred_check_branch
    %22 = sbr.rel (%p20) target = $region21
  $region20: #{densebackproj_forward.20} parent=0 // pred_region
    %23 = vst [vmem:[#allocation2] sm:$0xff] 0.0
  $region21: #{densebackproj_forward.20} parent=0 // pred_fallthru
    _
  %v24 = vld [vmem:[#allocation2] sm:$0xff]
  %v25 = vld [vmem:[%s0] sm:$0xff]
  %v26 = vld [vmem:[%s0 + $0x8] sm:$0xf]
  %v27 = vld [vmem:[%s1] sm:$0xf]
  %v28 = vld [vmem:[%s1 + $0x4] sm:$0xf]
  %v29 = vld [vmem:[%s1 + $0x8] sm:$0xf]
  %v30 = vld [vmem:[%s1 + $0xc] sm:$0xf]
  %v31 = vld [vmem:[%s1 + $0x10] sm:$0xf]
  %v32 = vld [vmem:[%s1 + $0x14] sm:$0xf]
  %v33 = vld [vmem:[%s1 + $0x18] sm:$0xf]
  %v34 = vld [vmem:[%s1 + $0x1c] sm:$0xf]
  %v35 = vld [vmem:[%s1 + $0x20] sm:$0xf]
  %v36 = vld [vmem:[%s1 + $0x24] sm:$0xf]
  %v37 = vld [vmem:[%s1 + $0x28] sm:$0xf]
  %v38 = vld [vmem:[%s1 + $0x2c] sm:$0xf]
  %v39 = vld [vmem:[%s1 + $0x30] sm:$0xf]
  %v40 = vld [vmem:[%s1 + $0x34] sm:$0xf]
  %v41 = vld [vmem:[%s1 + $0x38] sm:$0xf]
  %v42 = vld [vmem:[%s1 + $0x3c] sm:$0xf]
  %v43 = vld [vmem:[%s1 + $0x40] sm:$0xf]
  %v44 = vld [vmem:[%s1 + $0x44] sm:$0xf]
  %v45 = vld [vmem:[%s1 + $0x48] sm:$0xf]
  %v46 = vld [vmem:[%s1 + $0x4c] sm:$0xf]
  %v47 = vld [vmem:[%s1 + $0x50] sm:$0xf]
  %v48 = vld [vmem:[%s1 + $0x54] sm:$0xf]
  %v49 = vld [vmem:[%s1 + $0x58] sm:$0xf]
  %v50 = vld [vmem:[%s1 + $0x5c] sm:$0xf]
  %v51 = vld [vmem:[%s1 + $0x60] sm:$0xf]
  %v52 = vld [vmem:[%s1 + $0x64] sm:$0xf]
  %v53 = vld [vmem:[%s1 + $0x68] sm:$0xf]
  %v54 = vld [vmem:[%s1 + $0x6c] sm:$0xf]
  %v55 = vld [vmem:[%s1 + $0x70] sm:$0xf]
  %v56 = vld [vmem:[%s1 + $0x74] sm:$0xf]
  %v57 = vld [vmem:[%s1 + $0x78] sm:$0xf]
  %v58 = vld [vmem:[%s1 + $0x7c] sm:$0xf]
  %v59 = vld [vmem:[%s1 + $0x80] sm:$0xf]
  %v60 = vld [vmem:[%s1 + $0x84] sm:$0xf]
  %v61 = vld [vmem:[%s1 + $0x88] sm:$0xf]
  %v62 = vld [vmem:[%s1 + $0x8c] sm:$0xf]
  %v65 = vunpack.c.l.b16 %v25
  %v66 = vunpack.c.h.b16 %v25
  %v67 = vunpack.c.l.b16 %v26
  %v68 = vpack.c.b16 %v65, %v65
  %v69 = vpack.c.b16 %v66, %v66
  %v70 = vpack.c.b16 %v67, %v67
  %v109 = vunpack.c.l.b16 %v27
  %v110 = vunpack.c.l.b16 %v28
  %v111 = vunpack.c.l.b16 %v29
  %v112 = vunpack.c.l.b16 %v30
  %v113 = vunpack.c.l.b16 %v31
  %v114 = vunpack.c.l.b16 %v32
  %v115 = vunpack.c.l.b16 %v33
  %v116 = vunpack.c.l.b16 %v34
  %v117 = vunpack.c.l.b16 %v35
  %v118 = vunpack.c.l.b16 %v36
  %v119 = vunpack.c.l.b16 %v37
  %v120 = vunpack.c.l.b16 %v38
  %v121 = vunpack.c.l.b16 %v39
  %v122 = vunpack.c.l.b16 %v40
  %v123 = vunpack.c.l.b16 %v41
  %v124 = vunpack.c.l.b16 %v42
  %v125 = vunpack.c.l.b16 %v43
  %v126 = vunpack.c.l.b16 %v44
  %v127 = vunpack.c.l.b16 %v45
  %v128 = vunpack.c.l.b16 %v46
  %v129 = vunpack.c.l.b16 %v47
  %v130 = vunpack.c.l.b16 %v48
  %v131 = vunpack.c.l.b16 %v49
  %v132 = vunpack.c.l.b16 %v50
  %v133 = vunpack.c.l.b16 %v51
  %v134 = vunpack.c.l.b16 %v52
  %v135 = vunpack.c.l.b16 %v53
  %v136 = vunpack.c.l.b16 %v54
  %v137 = vunpack.c.l.b16 %v55
  %v138 = vunpack.c.l.b16 %v56
  %v139 = vunpack.c.l.b16 %v57
  %v140 = vunpack.c.l.b16 %v58
  %v141 = vunpack.c.l.b16 %v59
  %v142 = vunpack.c.l.b16 %v60
  %v143 = vunpack.c.l.b16 %v61
  %v144 = vunpack.c.l.b16 %v62
  %v145 = vpack.c.b16 %v110, %v109
  %v146 = vpack.c.b16 %v112, %v111
  %v147 = vpack.c.b16 %v114, %v113
  %v148 = vpack.c.b16 %v116, %v115
  %v149 = vpack.c.b16 %v118, %v117
  %v150 = vpack.c.b16 %v120, %v119
  %v151 = vpack.c.b16 %v122, %v121
  %v152 = vpack.c.b16 %v124, %v123
  %v153 = vpack.c.b16 %v126, %v125
  %v154 = vpack.c.b16 %v128, %v127
  %v155 = vpack.c.b16 %v130, %v129
  %v156 = vpack.c.b16 %v132, %v131
  %v157 = vpack.c.b16 %v134, %v133
  %v158 = vpack.c.b16 %v136, %v135
  %v159 = vpack.c.b16 %v138, %v137
  %v160 = vpack.c.b16 %v140, %v139
  %v161 = vpack.c.b16 %v142, %v141
  %v162 = vpack.c.b16 %v144, %v143
  %vm181 = vcmask 261120
  %v183 = vsel %vm181, %v70, 0
  %185 = vmatprep.subr.bf16.mxu0 0
  %186 = vmatpush1.bf16.msra.mxu0 %v145
  %187 = vmatprep.subr.bf16.mxu0 0
  %188 = vmatpush1.bf16.msra.mxu0 %v146
  %189 = vmatprep.subr.bf16.mxu0 0
  %190 = vmatpush1.bf16.msra.mxu0 %v147
  %191 = vmatprep.subr.bf16.mxu0 0
  %192 = vmatpush1.bf16.msra.mxu0 %v148
  %193 = vmatprep.subr.bf16.mxu0 0
  %194 = vmatpush1.bf16.msra.mxu0 %v149
  %195 = vmatprep.subr.bf16.mxu0 0
  %196 = vmatpush1.bf16.msra.mxu0 %v150
  %197 = vmatprep.subr.bf16.mxu0 0
  %198 = vmatpush1.bf16.msra.mxu0 %v151
  %199 = vmatprep.subr.bf16.mxu0 0
  %200 = vmatpush1.bf16.msra.mxu0 %v152
  %201 = vmatprep.subr.bf16.mxu0 0
  %202 = vmatpush1.bf16.msra.mxu0 %v153
  %203 = vmatprep.subr.bf16.mxu0 0
  %204 = vmatpush1.bf16.msra.mxu0 %v154
  %205 = vmatprep.subr.bf16.mxu0 0
  %206 = vmatpush1.bf16.msra.mxu0 %v155
  %207 = vmatprep.subr.bf16.mxu0 0
  %208 = vmatpush1.bf16.msra.mxu0 %v156
  %209 = vmatprep.subr.bf16.mxu0 0
  %210 = vmatpush1.bf16.msra.mxu0 %v157
  %211 = vmatprep.subr.bf16.mxu0 0
  %212 = vmatpush1.bf16.msra.mxu0 %v158
  %213 = vmatprep.subr.bf16.mxu0 0
  %214 = vmatpush1.bf16.msra.mxu0 %v159
  %215 = vmatprep.subr.bf16.mxu0 0
  %216 = vmatpush1.bf16.msra.mxu0 %v160
  %217 = vmatprep.mubr.bf16.mxu0 %v69
  %218 = vmatmul.mubr.bf16.gmra.mrb[0].mxu0 %v68
  %v219 = vpop.f32.mrb[0].mxu0
  %v220 = vadd.f32 0.0, %v219
  %v221 = vpop.f32.mrb[0].mxu0
  %v222 = vpop.f32.mrb[0].mxu0
  %v223 = vpop.f32.mrb[0].mxu0
  %224 = vdwg.mxu0
  %225 = vmatprep.subr.bf16.mxu0 0
  %226 = vmatpush1.bf16.msra.mxu0 %v161
  %227 = vmatprep.subr.bf16.mxu0 0
  %228 = vmatpush1.bf16.msra.mxu0 %v162
  %229 = vmatprep.subr.bf16.mxu0 0
  %230 = vmatpush1.bf16.msra.mxu0 0
  %231 = vmatprep.subr.bf16.mxu0 0
  %232 = vmatpush1.bf16.msra.mxu0 0
  %233 = vmatprep.subr.bf16.mxu0 0
  %234 = vmatpush1.bf16.msra.mxu0 0
  %235 = vmatprep.subr.bf16.mxu0 0
  %236 = vmatpush1.bf16.msra.mxu0 0
  %237 = vmatprep.subr.bf16.mxu0 0
  %238 = vmatpush1.bf16.msra.mxu0 0
  %239 = vmatprep.subr.bf16.mxu0 0
  %240 = vmatpush1.bf16.msra.mxu0 0
  %241 = vmatprep.subr.bf16.mxu0 0
  %242 = vmatpush1.bf16.msra.mxu0 0
  %243 = vmatprep.subr.bf16.mxu0 0
  %244 = vmatpush1.bf16.msra.mxu0 0
  %245 = vmatprep.subr.bf16.mxu0 0
  %246 = vmatpush1.bf16.msra.mxu0 0
  %247 = vmatprep.subr.bf16.mxu0 0
  %248 = vmatpush1.bf16.msra.mxu0 0
  %249 = vmatprep.subr.bf16.mxu0 0
  %250 = vmatpush1.bf16.msra.mxu0 0
  %251 = vmatprep.subr.bf16.mxu0 0
  %252 = vmatpush1.bf16.msra.mxu0 0
  %253 = vmatprep.subr.bf16.mxu0 0
  %254 = vmatpush1.bf16.msra.mxu0 0
  %255 = vmatprep.subr.bf16.mxu0 0
  %256 = vmatpush1.bf16.msra.mxu0 0
  %257 = vmatprep.mubr.bf16.mxu0 0
  %258 = vmatmul.mubr.bf16.gmra.mrb[0].mxu0 %v183
  %v259 = vpop.f32.mrb[0].mxu0
  %v260 = vadd.f32 %v220, %v259
  %v261 = vpop.f32.mrb[0].mxu0
  %v262 = vpop.f32.mrb[0].mxu0
  %v263 = vpop.f32.mrb[0].mxu0
  %264 = vdwg.mxu0
  %v265 = vadd.f32 %v24, %v260
  %266 = vst [vmem:[#allocation2] sm:$0xff] %v265
  // Predicated region
  $region22: #{densebackproj_forward.20} parent=0 // pred_check
    %p267 = pneg %p19
  $region23: #{densebackproj_forward.20} parent=0 // pred_check_branch
    %269 = sbr.rel (%p267) target = $region25
  $region24: #{densebackproj_forward.20} parent=0 // pred_region
    %v270 = vld [vmem:[#allocation2] sm:$0xff]
    %v271 = vld [vmem:[%s2] sm:$0xff]
    %273 = vset.pattern.permute.xlu0 0
    %274 = vperm.xlu0 %273, %v271
    %v275 = vpop.permute.xlu0 %274
    %v277 = vadd.f32 %v270, %v275
    %s278 = sld [smem:[#allocation3]]
    %vm279 = vcmp.ge.f32.partialorder %v277, 0.0
    %v280 = vstv %s278
    %v281 = vmul.f32 %v280, %v277
    %v282 = vsel %vm279, %v277, %v281
    %v283 = vpack.c.bf16 %v282, %v282
    %284 = vst [vmem:[%s4] sm:$0xf] %v283
  $region25: #{densebackproj_forward.20} parent=0 // pred_fallthru
    _
  // Predicated region
  $region26: #{densebackproj_forward.20} parent=0 // pred_check
    _
  $region27: #{densebackproj_forward.20} parent=0 // pred_check_branch
    %286 = sbr.rel (0) target = $region29
  $region28: #{densebackproj_forward.20} parent=0 // pred_region
    _
  $region29: #{densebackproj_forward.20} parent=0 // pred_fallthru
    _
  // Predicated region
  $region30: #{densebackproj_forward.20} parent=0 // pred_check
    _
  $region31: #{densebackproj_forward.20} parent=0 // pred_check_branch
    %288 = sbr.rel (0) target = $region33
  $region32: #{densebackproj_forward.20} parent=0 // pred_region
    _
  $region33: #{densebackproj_forward.20} parent=0 // pred_fallthru
    _

// kernel: densebackproj_forward.21
$region0: #{densebackproj_forward.21}
  #allocation0 [shape = 'u32[]', space=smem, size = 0x4, offset = 0x4, fixed_abs, tag = 'smem constant byte address 0x4 - core index']
  #allocation1 [shape = 'u32[144,128]{1,0:T(1,128)}', space=vmem, size = 0x12000, scoped, tag = 'internal scratch']
  #allocation2 [shape = 'f32[32,128]{1,0:T(8,128)}', space=vmem, size = 0x4000, scoped, tag = 'scratch operand']
  #allocation3 [shape = 'f32[1]{0:T(128)S(6)}', space=smem, size = 0x200, scoped, tag = 'scoped memory for densebackproj_forward.21']
  %s0 = inlined_call_operand.vmem [shape: bf16[32,72], index: 0, kind: input, shape index: {}]
  %s1 = inlined_call_operand.vmem [shape: bf16[72,128], index: 1, kind: input, shape index: {}]
  %s2 = inlined_call_operand.vmem [shape: f32[32,1], index: 2, kind: input, shape index: {}]
  %s3 = inlined_call_operand.<no memory space> [shape: f32[1], index: 3, kind: input, shape index: {}]
  %s4 = inlined_call_operand.vmem [shape: bf16[32,128], index: 4, kind: input, shape index: {}]
  %s5 = inlined_call_operand.vmem [shape: bf16[32,128], index: 5, kind: output, shape index: {}]
  %s6 = sld [smem:[#allocation0]]
  $region38: #{densebackproj_forward.21} parent=0
    _
  %s8 = ssub.s32 1, %s6
  %s9 = scalar_select 0, %s8, %s6
  %10 = sst [smem:[#allocation3]] %s3
  // Predicated region
  $region2: #{densebackproj_forward.21} parent=0 // pred_check
    _
  $region3: #{densebackproj_forward.21} parent=0 // pred_check_branch
    %12 = sbr.rel (0) target = $region5
  $region4: #{densebackproj_forward.21} parent=0 // pred_region
    _
  $region5: #{densebackproj_forward.21} parent=0 // pred_fallthru
    _
  // Predicated region
  $region6: #{densebackproj_forward.21} parent=0 // pred_check
    _
  $region7: #{densebackproj_forward.21} parent=0 // pred_check_branch
    %14 = sbr.rel (0) target = $region9
  $region8: #{densebackproj_forward.21} parent=0 // pred_region
    _
  $region9: #{densebackproj_forward.21} parent=0 // pred_fallthru
    _
  // Predicated region
  $region10: #{densebackproj_forward.21} parent=0 // pred_check
    _
  $region11: #{densebackproj_forward.21} parent=0 // pred_check_branch
    %16 = sbr.rel (0) target = $region13
  $region12: #{densebackproj_forward.21} parent=0 // pred_region
    _
  $region13: #{densebackproj_forward.21} parent=0 // pred_fallthru
    _
  // Predicated region
  $region14: #{densebackproj_forward.21} parent=0 // pred_check
    _
  $region15: #{densebackproj_forward.21} parent=0 // pred_check_branch
    %18 = sbr.rel (0) target = $region17
  $region16: #{densebackproj_forward.21} parent=0 // pred_region
    _
  $region17: #{densebackproj_forward.21} parent=0 // pred_fallthru
    _
  // Predicated region
  $region18: #{densebackproj_forward.21} parent=0 // pred_check
    _
  $region19: #{densebackproj_forward.21} parent=0 // pred_check_branch
    %20 = sbr.rel (0) target = $region21
  $region20: #{densebackproj_forward.21} parent=0 // pred_region
    _
  $region21: #{densebackproj_forward.21} parent=0 // pred_fallthru
    _
  %p22 = scmp.eq.s32.totalorder 0, 0
  // Predicated region
  $region22: #{densebackproj_forward.21} parent=0 // pred_check
    %p23 = pneg %p22
  $region23: #{densebackproj_forward.21} parent=0 // pred_check_branch
    %25 = sbr.rel (%p23) target = $region25
  $region24: #{densebackproj_forward.21} parent=0 // pred_region
    %26 = vst [vmem:[#allocation2] sm:$0xff] 0.0
    %27 = vst [vmem:[#allocation2 + $0x8] sm:$0xff] 0.0
    %28 = vst [vmem:[#allocation2 + $0x10] sm:$0xff] 0.0
    %29 = vst [vmem:[#allocation2 + $0x18] sm:$0xff] 0.0
  $region25: #{densebackproj_forward.21} parent=0 // pred_fallthru
    _
  %v30 = vld [vmem:[#allocation2] sm:$0xff]
  %v31 = vld [vmem:[#allocation2 + $0x8] sm:$0xff]
  %v32 = vld [vmem:[#allocation2 + $0x10] sm:$0xff]
  %v33 = vld [vmem:[#allocation2 + $0x18] sm:$0xff]
  %v34 = vld [vmem:[%s0] sm:$0xf]
  %v35 = vld [vmem:[%s0 + $0x4] sm:$0xf]
  %v36 = vld [vmem:[%s0 + $0x8] sm:$0xf]
  %v37 = vld [vmem:[%s0 + $0xc] sm:$0xf]
  %v38 = vld [vmem:[%s1] sm:$0xf]
  %v39 = vld [vmem:[%s1 + $0x4] sm:$0xf]
  %v40 = vld [vmem:[%s1 + $0x8] sm:$0xf]
  %v41 = vld [vmem:[%s1 + $0xc] sm:$0xf]
  %v42 = vld [vmem:[%s1 + $0x10] sm:$0xf]
  %v43 = vld [vmem:[%s1 + $0x14] sm:$0xf]
  %v44 = vld [vmem:[%s1 + $0x18] sm:$0xf]
  %v45 = vld [vmem:[%s1 + $0x1c] sm:$0xf]
  %v46 = vld [vmem:[%s1 + $0x20] sm:$0xf]
  %v51 = vunpack.c.l.b16 %v34
  %v52 = vunpack.c.l.b16 %v35
  %v53 = vunpack.c.l.b16 %v36
  %v54 = vunpack.c.l.b16 %v37
  %v55 = vpack.c.b16 %v52, %v51
  %v56 = vpack.c.b16 %v54, %v53
  %v66 = vunpack.c.l.b16 %v38
  %v67 = vunpack.c.l.b16 %v39
  %v68 = vunpack.c.l.b16 %v40
  %v69 = vunpack.c.l.b16 %v41
  %v70 = vunpack.c.l.b16 %v42
  %v71 = vunpack.c.l.b16 %v43
  %v72 = vunpack.c.l.b16 %v44
  %v73 = vunpack.c.l.b16 %v45
  %v74 = vunpack.c.l.b16 %v46
  %v75 = vpack.c.b16 %v67, %v66
  %v76 = vpack.c.b16 %v69, %v68
  %v77 = vpack.c.b16 %v71, %v70
  %v78 = vpack.c.b16 %v73, %v72
  %v79 = vpack.c.b16 %v74, %v74
  %vm84 = vcmask 588800
  %v86 = vsel %vm84, %v55, 0
  %v89 = vsel %vm84, %v56, 0
  %vm91 = vcmask 1043456
  %v93 = vsel %vm91, %v79, 0
  %95 = vmatprep.subr.bf16.mxu0 0
  %96 = vmatpush1.bf16.msra.mxu0 %v75
  %97 = vmatprep.subr.bf16.mxu0 0
  %98 = vmatpush1.bf16.msra.mxu0 %v76
  %99 = vmatprep.subr.bf16.mxu0 0
  %100 = vmatpush1.bf16.msra.mxu0 %v77
  %101 = vmatprep.subr.bf16.mxu0 0
  %102 = vmatpush1.bf16.msra.mxu0 %v78
  %103 = vmatprep.subr.bf16.mxu0 0
  %104 = vmatpush1.bf16.msra.mxu0 %v93
  %105 = vmatprep.subr.bf16.mxu0 0
  %106 = vmatpush1.bf16.msra.mxu0 0
  %107 = vmatprep.subr.bf16.mxu0 0
  %108 = vmatpush1.bf16.msra.mxu0 0
  %109 = vmatprep.subr.bf16.mxu0 0
  %110 = vmatpush1.bf16.msra.mxu0 0
  %111 = vmatprep.subr.bf16.mxu0 0
  %112 = vmatpush1.bf16.msra.mxu0 0
  %113 = vmatprep.subr.bf16.mxu0 0
  %114 = vmatpush1.bf16.msra.mxu0 0
  %115 = vmatprep.subr.bf16.mxu0 0
  %116 = vmatpush1.bf16.msra.mxu0 0
  %117 = vmatprep.subr.bf16.mxu0 0
  %118 = vmatpush1.bf16.msra.mxu0 0
  %119 = vmatprep.subr.bf16.mxu0 0
  %120 = vmatpush1.bf16.msra.mxu0 0
  %121 = vmatprep.subr.bf16.mxu0 0
  %122 = vmatpush1.bf16.msra.mxu0 0
  %123 = vmatprep.subr.bf16.mxu0 0
  %124 = vmatpush1.bf16.msra.mxu0 0
  %125 = vmatprep.subr.bf16.mxu0 0
  %126 = vmatpush1.bf16.msra.mxu0 0
  %127 = vmatprep.mubr.bf16.mxu0 0
  %128 = vmatmul.mubr.bf16.gmra.mrb[0].mxu0 %v86
  %v129 = vpop.f32.mrb[0].mxu0
  %v130 = vadd.f32 0.0, %v129
  %v131 = vpop.f32.mrb[0].mxu0
  %v132 = vpop.f32.mrb[0].mxu0
  %v133 = vadd.f32 0.0, %v132
  %v134 = vpop.f32.mrb[0].mxu0
  %135 = vmatprep.mubr.bf16.mxu0 0
  %136 = vmatmul.mubr.bf16.gmra.mrb[0].mxu0 %v89
  %v137 = vpop.f32.mrb[0].mxu0
  %v138 = vadd.f32 0.0, %v137
  %v139 = vpop.f32.mrb[0].mxu0
  %v140 = vpop.f32.mrb[0].mxu0
  %v141 = vadd.f32 0.0, %v140
  %v142 = vpop.f32.mrb[0].mxu0
  %143 = vdwg.mxu0
  %v144 = vadd.f32 %v30, %v130
  %v145 = vadd.f32 %v31, %v133
  %v146 = vadd.f32 %v32, %v138
  %v147 = vadd.f32 %v33, %v141
  %148 = vst [vmem:[#allocation2] sm:$0xff] %v144
  %149 = vst [vmem:[#allocation2 + $0x8] sm:$0xff] %v145
  %150 = vst [vmem:[#allocation2 + $0x10] sm:$0xff] %v146
  %151 = vst [vmem:[#allocation2 + $0x18] sm:$0xff] %v147
  // Predicated region
  $region26: #{densebackproj_forward.21} parent=0 // pred_check
    %p152 = pneg %p22
  $region27: #{densebackproj_forward.21} parent=0 // pred_check_branch
    %154 = sbr.rel (%p152) target = $region29
  $region28: #{densebackproj_forward.21} parent=0 // pred_region
    %v155 = vld [vmem:[#allocation2] sm:$0xff]
    %v156 = vld [vmem:[#allocation2 + $0x8] sm:$0xff]
    %v157 = vld [vmem:[#allocation2 + $0x10] sm:$0xff]
    %v158 = vld [vmem:[#allocation2 + $0x18] sm:$0xff]
    %v159 = vld [vmem:[%s2] sm:$0xff]
    %v160 = vld [vmem:[%s2 + $0x8] sm:$0xff]
    %v161 = vld [vmem:[%s2 + $0x10] sm:$0xff]
    %v162 = vld [vmem:[%s2 + $0x18] sm:$0xff]
    %164 = vset.pattern.permute.xlu0 0
    %165 = vperm.xlu0 %164, %v159
    %v166 = vpop.permute.xlu0 %165
    %169 = vset.pattern.permute.xlu0 0
    %170 = vperm.xlu0 %169, %v160
    %v171 = vpop.permute.xlu0 %170
    %174 = vset.pattern.permute.xlu0 0
    %175 = vperm.xlu0 %174, %v161
    %v176 = vpop.permute.xlu0 %175
    %179 = vset.pattern.permute.xlu0 0
    %180 = vperm.xlu0 %179, %v162
    %v181 = vpop.permute.xlu0 %180
    %v183 = vadd.f32 %v155, %v166
    %v184 = vadd.f32 %v156, %v171
    %v185 = vadd.f32 %v157, %v176
    %v186 = vadd.f32 %v158, %v181
    %s187 = sld [smem:[#allocation3]]
    %vm188 = vcmp.ge.f32.partialorder %v183, 0.0
    %vm189 = vcmp.ge.f32.partialorder %v184, 0.0
    %vm190 = vcmp.ge.f32.partialorder %v185, 0.0
    %vm191 = vcmp.ge.f32.partialorder %v186, 0.0
    %v192 = vstv %s187
    %v193 = vmul.f32 %v192, %v183
    %v194 = vmul.f32 %v192, %v184
    %v195 = vmul.f32 %v192, %v185
    %v196 = vmul.f32 %v192, %v186
    %v197 = vsel %vm188, %v183, %v193
    %v198 = vsel %vm189, %v184, %v194
    %v199 = vsel %vm190, %v185, %v195
    %v200 = vsel %vm191, %v186, %v196
    %v201 = vld [vmem:[%s4] sm:$0xf]
    %v202 = vld [vmem:[%s4 + $0x4] sm:$0xf]
    %v203 = vld [vmem:[%s4 + $0x8] sm:$0xf]
    %v204 = vld [vmem:[%s4 + $0xc] sm:$0xf]
    %v205 = vunpack.c.l.bf16 %v201
    %v206 = vunpack.c.l.bf16 %v202
    %v207 = vunpack.c.l.bf16 %v203
    %v208 = vunpack.c.l.bf16 %v204
    %v209 = vsub.f32 %v197, %v205
    %v210 = vsub.f32 %v198, %v206
    %v211 = vsub.f32 %v199, %v207
    %v212 = vsub.f32 %v200, %v208
    %v213 = vpack.c.bf16 %v210, %v209
    %v214 = vpack.c.bf16 %v212, %v211
    %v217 = vunpack.c.l.b16 %v213
    %v218 = vunpack.c.h.b16 %v213
    %v219 = vunpack.c.l.b16 %v214
    %v220 = vunpack.c.h.b16 %v214
    %v221 = vpack.c.b16 %v217, %v217
    %v222 = vpack.c.b16 %v218, %v218
    %v223 = vpack.c.b16 %v219, %v219
    %v224 = vpack.c.b16 %v220, %v220
    %229 = vst [vmem:[%s5] sm:$0xf] %v221
    %230 = vst [vmem:[%s5 + $0x4] sm:$0xf] %v222
    %231 = vst [vmem:[%s5 + $0x8] sm:$0xf] %v223
    %232 = vst [vmem:[%s5 + $0xc] sm:$0xf] %v224
  $region29: #{densebackproj_forward.21} parent=0 // pred_fallthru
    _
  // Predicated region
  $region30: #{densebackproj_forward.21} parent=0 // pred_check
    _
  $region31: #{densebackproj_forward.21} parent=0 // pred_check_branch
    %234 = sbr.rel (0) target = $region33
  $region32: #{densebackproj_forward.21} parent=0 // pred_region
    _
  $region33: #{densebackproj_forward.21} parent=0 // pred_fallthru
    _
  // Predicated region
  $region34: #{densebackproj_forward.21} parent=0 // pred_check
    _
  $region35: #{densebackproj_forward.21} parent=0 // pred_check_branch
    %236 = sbr.rel (0) target = $region37
  $region36: #{densebackproj_forward.21} parent=0 // pred_region
    _
  $region37: #{densebackproj_forward.21} parent=0 // pred_fallthru
    _

// kernel: densebackproj_forward.22
$region0: #{densebackproj_forward.22}
  #allocation0 [shape = 'u32[]', space=smem, size = 0x4, offset = 0x4, fixed_abs, tag = 'smem constant byte address 0x4 - core index']
  #allocation1 [shape = 'u32[144,128]{1,0:T(1,128)}', space=vmem, size = 0x12000, scoped, tag = 'internal scratch']
  #allocation2 [shape = 'f32[8,128]{1,0:T(8,128)}', space=vmem, size = 0x1000, scoped, tag = 'scratch operand']
  #allocation3 [shape = 'f32[1]{0:T(128)S(6)}', space=smem, size = 0x200, scoped, tag = 'scoped memory for densebackproj_forward.22']
  %s0 = inlined_call_operand.vmem [shape: bf16[8,288], index: 0, kind: input, shape index: {}]
  %s1 = inlined_call_operand.vmem [shape: bf16[288,128], index: 1, kind: input, shape index: {}]
  %s2 = inlined_call_operand.vmem [shape: f32[8,1], index: 2, kind: input, shape index: {}]
  %s3 = inlined_call_operand.<no memory space> [shape: f32[1], index: 3, kind: input, shape index: {}]
  %s4 = inlined_call_operand.vmem [shape: bf16[8,128], index: 4, kind: input, shape index: {}]
  %s5 = inlined_call_operand.vmem [shape: bf16[8,128], index: 5, kind: output, shape index: {}]
  %s6 = sld [smem:[#allocation0]]
  $region38: #{densebackproj_forward.22} parent=0
    _
  %s8 = ssub.s32 1, %s6
  %s9 = scalar_select 0, %s8, %s6
  %10 = sst [smem:[#allocation3]] %s3
  // Predicated region
  $region2: #{densebackproj_forward.22} parent=0 // pred_check
    _
  $region3: #{densebackproj_forward.22} parent=0 // pred_check_branch
    %12 = sbr.rel (0) target = $region5
  $region4: #{densebackproj_forward.22} parent=0 // pred_region
    _
  $region5: #{densebackproj_forward.22} parent=0 // pred_fallthru
    _
  // Predicated region
  $region6: #{densebackproj_forward.22} parent=0 // pred_check
    _
  $region7: #{densebackproj_forward.22} parent=0 // pred_check_branch
    %14 = sbr.rel (0) target = $region9
  $region8: #{densebackproj_forward.22} parent=0 // pred_region
    _
  $region9: #{densebackproj_forward.22} parent=0 // pred_fallthru
    _
  // Predicated region
  $region10: #{densebackproj_forward.22} parent=0 // pred_check
    _
  $region11: #{densebackproj_forward.22} parent=0 // pred_check_branch
    %16 = sbr.rel (0) target = $region13
  $region12: #{densebackproj_forward.22} parent=0 // pred_region
    _
  $region13: #{densebackproj_forward.22} parent=0 // pred_fallthru
    _
  // Predicated region
  $region14: #{densebackproj_forward.22} parent=0 // pred_check
    _
  $region15: #{densebackproj_forward.22} parent=0 // pred_check_branch
    %18 = sbr.rel (0) target = $region17
  $region16: #{densebackproj_forward.22} parent=0 // pred_region
    _
  $region17: #{densebackproj_forward.22} parent=0 // pred_fallthru
    _
  // Predicated region
  $region18: #{densebackproj_forward.22} parent=0 // pred_check
    _
  $region19: #{densebackproj_forward.22} parent=0 // pred_check_branch
    %20 = sbr.rel (0) target = $region21
  $region20: #{densebackproj_forward.22} parent=0 // pred_region
    _
  $region21: #{densebackproj_forward.22} parent=0 // pred_fallthru
    _
  %p22 = scmp.eq.s32.totalorder 0, 0
  // Predicated region
  $region22: #{densebackproj_forward.22} parent=0 // pred_check
    %p23 = pneg %p22
  $region23: #{densebackproj_forward.22} parent=0 // pred_check_branch
    %25 = sbr.rel (%p23) target = $region25
  $region24: #{densebackproj_forward.22} parent=0 // pred_region
    %26 = vst [vmem:[#allocation2] sm:$0xff] 0.0
  $region25: #{densebackproj_forward.22} parent=0 // pred_fallthru
    _
  %v27 = vld [vmem:[#allocation2] sm:$0xff]
  %v28 = vld [vmem:[%s0] sm:$0xff]
  %v29 = vld [vmem:[%s0 + $0x8] sm:$0xf]
  %v30 = vld [vmem:[%s1] sm:$0xf]
  %v31 = vld [vmem:[%s1 + $0x4] sm:$0xf]
  %v32 = vld [vmem:[%s1 + $0x8] sm:$0xf]
  %v33 = vld [vmem:[%s1 + $0xc] sm:$0xf]
  %v34 = vld [vmem:[%s1 + $0x10] sm:$0xf]
  %v35 = vld [vmem:[%s1 + $0x14] sm:$0xf]
  %v36 = vld [vmem:[%s1 + $0x18] sm:$0xf]
  %v37 = vld [vmem:[%s1 + $0x1c] sm:$0xf]
  %v38 = vld [vmem:[%s1 + $0x20] sm:$0xf]
  %v39 = vld [vmem:[%s1 + $0x24] sm:$0xf]
  %v40 = vld [vmem:[%s1 + $0x28] sm:$0xf]
  %v41 = vld [vmem:[%s1 + $0x2c] sm:$0xf]
  %v42 = vld [vmem:[%s1 + $0x30] sm:$0xf]
  %v43 = vld [vmem:[%s1 + $0x34] sm:$0xf]
  %v44 = vld [vmem:[%s1 + $0x38] sm:$0xf]
  %v45 = vld [vmem:[%s1 + $0x3c] sm:$0xf]
  %v46 = vld [vmem:[%s1 + $0x40] sm:$0xf]
  %v47 = vld [vmem:[%s1 + $0x44] sm:$0xf]
  %v48 = vld [vmem:[%s1 + $0x48] sm:$0xf]
  %v49 = vld [vmem:[%s1 + $0x4c] sm:$0xf]
  %v50 = vld [vmem:[%s1 + $0x50] sm:$0xf]
  %v51 = vld [vmem:[%s1 + $0x54] sm:$0xf]
  %v52 = vld [vmem:[%s1 + $0x58] sm:$0xf]
  %v53 = vld [vmem:[%s1 + $0x5c] sm:$0xf]
  %v54 = vld [vmem:[%s1 + $0x60] sm:$0xf]
  %v55 = vld [vmem:[%s1 + $0x64] sm:$0xf]
  %v56 = vld [vmem:[%s1 + $0x68] sm:$0xf]
  %v57 = vld [vmem:[%s1 + $0x6c] sm:$0xf]
  %v58 = vld [vmem:[%s1 + $0x70] sm:$0xf]
  %v59 = vld [vmem:[%s1 + $0x74] sm:$0xf]
  %v60 = vld [vmem:[%s1 + $0x78] sm:$0xf]
  %v61 = vld [vmem:[%s1 + $0x7c] sm:$0xf]
  %v62 = vld [vmem:[%s1 + $0x80] sm:$0xf]
  %v63 = vld [vmem:[%s1 + $0x84] sm:$0xf]
  %v64 = vld [vmem:[%s1 + $0x88] sm:$0xf]
  %v65 = vld [vmem:[%s1 + $0x8c] sm:$0xf]
  %v68 = vunpack.c.l.b16 %v28
  %v69 = vunpack.c.h.b16 %v28
  %v70 = vunpack.c.l.b16 %v29
  %v71 = vpack.c.b16 %v68, %v68
  %v72 = vpack.c.b16 %v69, %v69
  %v73 = vpack.c.b16 %v70, %v70
  %v112 = vunpack.c.l.b16 %v30
  %v113 = vunpack.c.l.b16 %v31
  %v114 = vunpack.c.l.b16 %v32
  %v115 = vunpack.c.l.b16 %v33
  %v116 = vunpack.c.l.b16 %v34
  %v117 = vunpack.c.l.b16 %v35
  %v118 = vunpack.c.l.b16 %v36
  %v119 = vunpack.c.l.b16 %v37
  %v120 = vunpack.c.l.b16 %v38
  %v121 = vunpack.c.l.b16 %v39
  %v122 = vunpack.c.l.b16 %v40
  %v123 = vunpack.c.l.b16 %v41
  %v124 = vunpack.c.l.b16 %v42
  %v125 = vunpack.c.l.b16 %v43
  %v126 = vunpack.c.l.b16 %v44
  %v127 = vunpack.c.l.b16 %v45
  %v128 = vunpack.c.l.b16 %v46
  %v129 = vunpack.c.l.b16 %v47
  %v130 = vunpack.c.l.b16 %v48
  %v131 = vunpack.c.l.b16 %v49
  %v132 = vunpack.c.l.b16 %v50
  %v133 = vunpack.c.l.b16 %v51
  %v134 = vunpack.c.l.b16 %v52
  %v135 = vunpack.c.l.b16 %v53
  %v136 = vunpack.c.l.b16 %v54
  %v137 = vunpack.c.l.b16 %v55
  %v138 = vunpack.c.l.b16 %v56
  %v139 = vunpack.c.l.b16 %v57
  %v140 = vunpack.c.l.b16 %v58
  %v141 = vunpack.c.l.b16 %v59
  %v142 = vunpack.c.l.b16 %v60
  %v143 = vunpack.c.l.b16 %v61
  %v144 = vunpack.c.l.b16 %v62
  %v145 = vunpack.c.l.b16 %v63
  %v146 = vunpack.c.l.b16 %v64
  %v147 = vunpack.c.l.b16 %v65
  %v148 = vpack.c.b16 %v113, %v112
  %v149 = vpack.c.b16 %v115, %v114
  %v150 = vpack.c.b16 %v117, %v116
  %v151 = vpack.c.b16 %v119, %v118
  %v152 = vpack.c.b16 %v121, %v120
  %v153 = vpack.c.b16 %v123, %v122
  %v154 = vpack.c.b16 %v125, %v124
  %v155 = vpack.c.b16 %v127, %v126
  %v156 = vpack.c.b16 %v129, %v128
  %v157 = vpack.c.b16 %v131, %v130
  %v158 = vpack.c.b16 %v133, %v132
  %v159 = vpack.c.b16 %v135, %v134
  %v160 = vpack.c.b16 %v137, %v136
  %v161 = vpack.c.b16 %v139, %v138
  %v162 = vpack.c.b16 %v141, %v140
  %v163 = vpack.c.b16 %v143, %v142
  %v164 = vpack.c.b16 %v145, %v144
  %v165 = vpack.c.b16 %v147, %v146
  %vm184 = vcmask 261120
  %v186 = vsel %vm184, %v73, 0
  %188 = vmatprep.subr.bf16.mxu0 0
  %189 = vmatpush1.bf16.msra.mxu0 %v148
  %190 = vmatprep.subr.bf16.mxu0 0
  %191 = vmatpush1.bf16.msra.mxu0 %v149
  %192 = vmatprep.subr.bf16.mxu0 0
  %193 = vmatpush1.bf16.msra.mxu0 %v150
  %194 = vmatprep.subr.bf16.mxu0 0
  %195 = vmatpush1.bf16.msra.mxu0 %v151
  %196 = vmatprep.subr.bf16.mxu0 0
  %197 = vmatpush1.bf16.msra.mxu0 %v152
  %198 = vmatprep.subr.bf16.mxu0 0
  %199 = vmatpush1.bf16.msra.mxu0 %v153
  %200 = vmatprep.subr.bf16.mxu0 0
  %201 = vmatpush1.bf16.msra.mxu0 %v154
  %202 = vmatprep.subr.bf16.mxu0 0
  %203 = vmatpush1.bf16.msra.mxu0 %v155
  %204 = vmatprep.subr.bf16.mxu0 0
  %205 = vmatpush1.bf16.msra.mxu0 %v156
  %206 = vmatprep.subr.bf16.mxu0 0
  %207 = vmatpush1.bf16.msra.mxu0 %v157
  %208 = vmatprep.subr.bf16.mxu0 0
  %209 = vmatpush1.bf16.msra.mxu0 %v158
  %210 = vmatprep.subr.bf16.mxu0 0
  %211 = vmatpush1.bf16.msra.mxu0 %v159
  %212 = vmatprep.subr.bf16.mxu0 0
  %213 = vmatpush1.bf16.msra.mxu0 %v160
  %214 = vmatprep.subr.bf16.mxu0 0
  %215 = vmatpush1.bf16.msra.mxu0 %v161
  %216 = vmatprep.subr.bf16.mxu0 0
  %217 = vmatpush1.bf16.msra.mxu0 %v162
  %218 = vmatprep.subr.bf16.mxu0 0
  %219 = vmatpush1.bf16.msra.mxu0 %v163
  %220 = vmatprep.mubr.bf16.mxu0 %v72
  %221 = vmatmul.mubr.bf16.gmra.mrb[0].mxu0 %v71
  %v222 = vpop.f32.mrb[0].mxu0
  %v223 = vadd.f32 0.0, %v222
  %v224 = vpop.f32.mrb[0].mxu0
  %v225 = vpop.f32.mrb[0].mxu0
  %v226 = vpop.f32.mrb[0].mxu0
  %227 = vdwg.mxu0
  %228 = vmatprep.subr.bf16.mxu0 0
  %229 = vmatpush1.bf16.msra.mxu0 %v164
  %230 = vmatprep.subr.bf16.mxu0 0
  %231 = vmatpush1.bf16.msra.mxu0 %v165
  %232 = vmatprep.subr.bf16.mxu0 0
  %233 = vmatpush1.bf16.msra.mxu0 0
  %234 = vmatprep.subr.bf16.mxu0 0
  %235 = vmatpush1.bf16.msra.mxu0 0
  %236 = vmatprep.subr.bf16.mxu0 0
  %237 = vmatpush1.bf16.msra.mxu0 0
  %238 = vmatprep.subr.bf16.mxu0 0
  %239 = vmatpush1.bf16.msra.mxu0 0
  %240 = vmatprep.subr.bf16.mxu0 0
  %241 = vmatpush1.bf16.msra.mxu0 0
  %242 = vmatprep.subr.bf16.mxu0 0
  %243 = vmatpush1.bf16.msra.mxu0 0
  %244 = vmatprep.subr.bf16.mxu0 0
  %245 = vmatpush1.bf16.msra.mxu0 0
  %246 = vmatprep.subr.bf16.mxu0 0
  %247 = vmatpush1.bf16.msra.mxu0 0
  %248 = vmatprep.subr.bf16.mxu0 0
  %249 = vmatpush1.bf16.msra.mxu0 0
  %250 = vmatprep.subr.bf16.mxu0 0
  %251 = vmatpush1.bf16.msra.mxu0 0
  %252 = vmatprep.subr.bf16.mxu0 0
  %253 = vmatpush1.bf16.msra.mxu0 0
  %254 = vmatprep.subr.bf16.mxu0 0
  %255 = vmatpush1.bf16.msra.mxu0 0
  %256 = vmatprep.subr.bf16.mxu0 0
  %257 = vmatpush1.bf16.msra.mxu0 0
  %258 = vmatprep.subr.bf16.mxu0 0
  %259 = vmatpush1.bf16.msra.mxu0 0
  %260 = vmatprep.mubr.bf16.mxu0 0
  %261 = vmatmul.mubr.bf16.gmra.mrb[0].mxu0 %v186
  %v262 = vpop.f32.mrb[0].mxu0
  %v263 = vadd.f32 %v223, %v262
  %v264 = vpop.f32.mrb[0].mxu0
  %v265 = vpop.f32.mrb[0].mxu0
  %v266 = vpop.f32.mrb[0].mxu0
  %267 = vdwg.mxu0
  %v268 = vadd.f32 %v27, %v263
  %269 = vst [vmem:[#allocation2] sm:$0xff] %v268
  // Predicated region
  $region26: #{densebackproj_forward.22} parent=0 // pred_check
    %p270 = pneg %p22
  $region27: #{densebackproj_forward.22} parent=0 // pred_check_branch
    %272 = sbr.rel (%p270) target = $region29
  $region28: #{densebackproj_forward.22} parent=0 // pred_region
    %v273 = vld [vmem:[#allocation2] sm:$0xff]
    %v274 = vld [vmem:[%s2] sm:$0xff]
    %276 = vset.pattern.permute.xlu0 0
    %277 = vperm.xlu0 %276, %v274
    %v278 = vpop.permute.xlu0 %277
    %v280 = vadd.f32 %v273, %v278
    %s281 = sld [smem:[#allocation3]]
    %vm282 = vcmp.ge.f32.partialorder %v280, 0.0
    %v283 = vstv %s281
    %v284 = vmul.f32 %v283, %v280
    %v285 = vsel %vm282, %v280, %v284
    %v286 = vld [vmem:[%s4] sm:$0xf]
    %v287 = vunpack.c.l.bf16 %v286
    %v288 = vadd.f32 %v285, %v287
    %v289 = vpack.c.bf16 %v288, %v288
    %290 = vst [vmem:[%s5] sm:$0xf] %v289
  $region29: #{densebackproj_forward.22} parent=0 // pred_fallthru
    _
  // Predicated region
  $region30: #{densebackproj_forward.22} parent=0 // pred_check
    _
  $region31: #{densebackproj_forward.22} parent=0 // pred_check_branch
    %292 = sbr.rel (0) target = $region33
  $region32: #{densebackproj_forward.22} parent=0 // pred_region
    _
  $region33: #{densebackproj_forward.22} parent=0 // pred_fallthru
    _
  // Predicated region
  $region34: #{densebackproj_forward.22} parent=0 // pred_check
    _
  $region35: #{densebackproj_forward.22} parent=0 // pred_check_branch
    %294 = sbr.rel (0) target = $region37
  $region36: #{densebackproj_forward.22} parent=0 // pred_region
    _
  $region37: #{densebackproj_forward.22} parent=0 // pred_fallthru
    _

// kernel: densebackproj_forward.26
$region0: #{densebackproj_forward.26}
  #allocation0 [shape = 'u32[]', space=smem, size = 0x4, offset = 0x4, fixed_abs, tag = 'smem constant byte address 0x4 - core index']
  #allocation1 [shape = 'u32[144,128]{1,0:T(1,128)}', space=vmem, size = 0x12000, scoped, tag = 'internal scratch']
  #allocation2 [shape = 'f32[8,512]{1,0:T(8,128)}', space=vmem, size = 0x4000, scoped, tag = 'scratch operand']
  #allocation3 [shape = 'f32[1]{0:T(128)S(6)}', space=smem, size = 0x200, scoped, tag = 'scoped memory for densebackproj_forward.26']
  %s0 = inlined_call_operand.vmem [shape: bf16[8,16], index: 0, kind: input, shape index: {}]
  %s1 = inlined_call_operand.vmem [shape: bf16[16,512], index: 1, kind: input, shape index: {}]
  %s2 = inlined_call_operand.vmem [shape: f32[8,1], index: 2, kind: input, shape index: {}]
  %s3 = inlined_call_operand.<no memory space> [shape: f32[1], index: 3, kind: input, shape index: {}]
  %s4 = inlined_call_operand.vmem [shape: bf16[8,512], index: 4, kind: output, shape index: {}]
  %s5 = sld [smem:[#allocation0]]
  $region34: #{densebackproj_forward.26} parent=0
    _
  %s7 = ssub.s32 1, %s5
  %s8 = scalar_select 0, %s7, %s5
  %9 = sst [smem:[#allocation3]] %s3
  // Predicated region
  $region2: #{densebackproj_forward.26} parent=0 // pred_check
    _
  $region3: #{densebackproj_forward.26} parent=0 // pred_check_branch
    %11 = sbr.rel (0) target = $region5
  $region4: #{densebackproj_forward.26} parent=0 // pred_region
    _
  $region5: #{densebackproj_forward.26} parent=0 // pred_fallthru
    _
  // Predicated region
  $region6: #{densebackproj_forward.26} parent=0 // pred_check
    _
  $region7: #{densebackproj_forward.26} parent=0 // pred_check_branch
    %13 = sbr.rel (0) target = $region9
  $region8: #{densebackproj_forward.26} parent=0 // pred_region
    _
  $region9: #{densebackproj_forward.26} parent=0 // pred_fallthru
    _
  // Predicated region
  $region10: #{densebackproj_forward.26} parent=0 // pred_check
    _
  $region11: #{densebackproj_forward.26} parent=0 // pred_check_branch
    %15 = sbr.rel (0) target = $region13
  $region12: #{densebackproj_forward.26} parent=0 // pred_region
    _
  $region13: #{densebackproj_forward.26} parent=0 // pred_fallthru
    _
  // Predicated region
  $region14: #{densebackproj_forward.26} parent=0 // pred_check
    _
  $region15: #{densebackproj_forward.26} parent=0 // pred_check_branch
    %17 = sbr.rel (0) target = $region17
  $region16: #{densebackproj_forward.26} parent=0 // pred_region
    _
  $region17: #{densebackproj_forward.26} parent=0 // pred_fallthru
    _
  %p19 = scmp.eq.s32.totalorder 0, 0
  // Predicated region
  $region18: #{densebackproj_forward.26} parent=0 // pred_check
    %p20 = pneg %p19
  $region19: #{densebackproj_forward.26} parent=0 // pred_check_branch
    %22 = sbr.rel (%p20) target = $region21
  $region20: #{densebackproj_forward.26} parent=0 // pred_region
    %23 = vst [vmem:[#allocation2] sm:$0xff] 0.0
    %24 = vst [vmem:[#allocation2 + $0x8] sm:$0xff] 0.0
    %25 = vst [vmem:[#allocation2 + $0x10] sm:$0xff] 0.0
    %26 = vst [vmem:[#allocation2 + $0x18] sm:$0xff] 0.0
  $region21: #{densebackproj_forward.26} parent=0 // pred_fallthru
    _
  %v27 = vld [vmem:[#allocation2] sm:$0xff]
  %v28 = vld [vmem:[#allocation2 + $0x8] sm:$0xff]
  %v29 = vld [vmem:[#allocation2 + $0x10] sm:$0xff]
  %v30 = vld [vmem:[#allocation2 + $0x18] sm:$0xff]
  %v31 = vld [vmem:[%s0] sm:$0xf]
  %v32 = vld [vmem:[%s1] sm:$0xff]
  %v33 = vld [vmem:[%s1 + $0x8] sm:$0xff]
  %v34 = vld [vmem:[%s1 + $0x10] sm:$0xff]
  %v35 = vld [vmem:[%s1 + $0x18] sm:$0xff]
  %v40 = vunpack.c.l.b16 %v32
  %v41 = vunpack.c.h.b16 %v32
  %v42 = vunpack.c.l.b16 %v33
  %v43 = vunpack.c.h.b16 %v33
  %v44 = vunpack.c.l.b16 %v34
  %v45 = vunpack.c.h.b16 %v34
  %v46 = vunpack.c.l.b16 %v35
  %v47 = vunpack.c.h.b16 %v35
  %v48 = vpack.c.b16 %v44, %v40
  %v49 = vpack.c.b16 %v45, %v41
  %v50 = vpack.c.b16 %v46, %v42
  %v51 = vpack.c.b16 %v47, %v43
  %vm56 = vcmask 130048
  %v58 = vsel %vm56, %v31, 0
  %60 = vmatprep.subr.bf16.mxu0 %v49
  %61 = vmatpush1.bf16.msra.mxu0 %v48
  %62 = vmatprep.subr.bf16.mxu0 0
  %63 = vmatpush1.bf16.msra.mxu0 0
  %64 = vmatprep.subr.bf16.mxu0 0
  %65 = vmatpush1.bf16.msra.mxu0 0
  %66 = vmatprep.subr.bf16.mxu0 0
  %67 = vmatpush1.bf16.msra.mxu0 0
  %68 = vmatprep.subr.bf16.mxu0 0
  %69 = vmatpush1.bf16.msra.mxu0 0
  %70 = vmatprep.subr.bf16.mxu0 0
  %71 = vmatpush1.bf16.msra.mxu0 0
  %72 = vmatprep.subr.bf16.mxu0 0
  %73 = vmatpush1.bf16.msra.mxu0 0
  %74 = vmatprep.subr.bf16.mxu0 0
  %75 = vmatpush1.bf16.msra.mxu0 0
  %76 = vmatprep.subr.bf16.mxu0 0
  %77 = vmatpush1.bf16.msra.mxu0 0
  %78 = vmatprep.subr.bf16.mxu0 0
  %79 = vmatpush1.bf16.msra.mxu0 0
  %80 = vmatprep.subr.bf16.mxu0 0
  %81 = vmatpush1.bf16.msra.mxu0 0
  %82 = vmatprep.subr.bf16.mxu0 0
  %83 = vmatpush1.bf16.msra.mxu0 0
  %84 = vmatprep.subr.bf16.mxu0 0
  %85 = vmatpush1.bf16.msra.mxu0 0
  %86 = vmatprep.subr.bf16.mxu0 0
  %87 = vmatpush1.bf16.msra.mxu0 0
  %88 = vmatprep.subr.bf16.mxu0 0
  %89 = vmatpush1.bf16.msra.mxu0 0
  %90 = vmatprep.subr.bf16.mxu0 0
  %91 = vmatpush1.bf16.msra.mxu0 0
  %92 = vmatprep.mubr.bf16.mxu0 0
  %93 = vmatmul.mubr.bf16.gmra.mrb[0].mxu0 %v58
  %v94 = vpop.f32.mrb[0].mxu0
  %v95 = vadd.f32 0.0, %v94
  %v96 = vpop.f32.mrb[0].mxu0
  %v97 = vadd.f32 0.0, %v96
  %v98 = vpop.f32.mrb[0].mxu0
  %v99 = vpop.f32.mrb[0].mxu0
  %100 = vdwg.mxu0
  %101 = vmatprep.subr.bf16.mxu0 %v51
  %102 = vmatpush1.bf16.msra.mxu0 %v50
  %103 = vmatprep.subr.bf16.mxu0 0
  %104 = vmatpush1.bf16.msra.mxu0 0
  %105 = vmatprep.subr.bf16.mxu0 0
  %106 = vmatpush1.bf16.msra.mxu0 0
  %107 = vmatprep.subr.bf16.mxu0 0
  %108 = vmatpush1.bf16.msra.mxu0 0
  %109 = vmatprep.subr.bf16.mxu0 0
  %110 = vmatpush1.bf16.msra.mxu0 0
  %111 = vmatprep.subr.bf16.mxu0 0
  %112 = vmatpush1.bf16.msra.mxu0 0
  %113 = vmatprep.subr.bf16.mxu0 0
  %114 = vmatpush1.bf16.msra.mxu0 0
  %115 = vmatprep.subr.bf16.mxu0 0
  %116 = vmatpush1.bf16.msra.mxu0 0
  %117 = vmatprep.subr.bf16.mxu0 0
  %118 = vmatpush1.bf16.msra.mxu0 0
  %119 = vmatprep.subr.bf16.mxu0 0
  %120 = vmatpush1.bf16.msra.mxu0 0
  %121 = vmatprep.subr.bf16.mxu0 0
  %122 = vmatpush1.bf16.msra.mxu0 0
  %123 = vmatprep.subr.bf16.mxu0 0
  %124 = vmatpush1.bf16.msra.mxu0 0
  %125 = vmatprep.subr.bf16.mxu0 0
  %126 = vmatpush1.bf16.msra.mxu0 0
  %127 = vmatprep.subr.bf16.mxu0 0
  %128 = vmatpush1.bf16.msra.mxu0 0
  %129 = vmatprep.subr.bf16.mxu0 0
  %130 = vmatpush1.bf16.msra.mxu0 0
  %131 = vmatprep.subr.bf16.mxu0 0
  %132 = vmatpush1.bf16.msra.mxu0 0
  %133 = vmatprep.mubr.bf16.mxu0 0
  %134 = vmatmul.mubr.bf16.gmra.mrb[0].mxu0 %v58
  %v135 = vpop.f32.mrb[0].mxu0
  %v136 = vadd.f32 0.0, %v135
  %v137 = vpop.f32.mrb[0].mxu0
  %v138 = vadd.f32 0.0, %v137
  %v139 = vpop.f32.mrb[0].mxu0
  %v140 = vpop.f32.mrb[0].mxu0
  %141 = vdwg.mxu0
  %v142 = vadd.f32 %v27, %v95
  %v143 = vadd.f32 %v28, %v97
  %v144 = vadd.f32 %v29, %v136
  %v145 = vadd.f32 %v30, %v138
  %146 = vst [vmem:[#allocation2] sm:$0xff] %v142
  %147 = vst [vmem:[#allocation2 + $0x8] sm:$0xff] %v143
  %148 = vst [vmem:[#allocation2 + $0x10] sm:$0xff] %v144
  %149 = vst [vmem:[#allocation2 + $0x18] sm:$0xff] %v145
  // Predicated region
  $region22: #{densebackproj_forward.26} parent=0 // pred_check
    %p150 = pneg %p19
  $region23: #{densebackproj_forward.26} parent=0 // pred_check_branch
    %152 = sbr.rel (%p150) target = $region25
  $region24: #{densebackproj_forward.26} parent=0 // pred_region
    %v153 = vld [vmem:[#allocation2] sm:$0xff]
    %v154 = vld [vmem:[#allocation2 + $0x8] sm:$0xff]
    %v155 = vld [vmem:[#allocation2 + $0x10] sm:$0xff]
    %v156 = vld [vmem:[#allocation2 + $0x18] sm:$0xff]
    %v157 = vld [vmem:[%s2] sm:$0xff]
    %159 = vset.pattern.permute.xlu0 0
    %160 = vperm.xlu0 %159, %v157
    %v161 = vpop.permute.xlu0 %160
    %v163 = vadd.f32 %v153, %v161
    %v164 = vadd.f32 %v154, %v161
    %v165 = vadd.f32 %v155, %v161
    %v166 = vadd.f32 %v156, %v161
    %s167 = sld [smem:[#allocation3]]
    %vm168 = vcmp.ge.f32.partialorder %v163, 0.0
    %vm169 = vcmp.ge.f32.partialorder %v164, 0.0
    %vm170 = vcmp.ge.f32.partialorder %v165, 0.0
    %vm171 = vcmp.ge.f32.partialorder %v166, 0.0
    %v172 = vstv %s167
    %v173 = vmul.f32 %v172, %v163
    %v174 = vmul.f32 %v172, %v164
    %v175 = vmul.f32 %v172, %v165
    %v176 = vmul.f32 %v172, %v166
    %v177 = vsel %vm168, %v163, %v173
    %v178 = vsel %vm169, %v164, %v174
    %v179 = vsel %vm170, %v165, %v175
    %v180 = vsel %vm171, %v166, %v176
    %v181 = vpack.c.bf16 %v177, %v177
    %v182 = vpack.c.bf16 %v178, %v178
    %v183 = vpack.c.bf16 %v179, %v179
    %v184 = vpack.c.bf16 %v180, %v180
    %v189 = vunpack.c.l.b16 %v181
    %v190 = vunpack.c.l.b16 %v182
    %v191 = vunpack.c.l.b16 %v183
    %v192 = vunpack.c.l.b16 %v184
    %v193 = vpack.c.b16 %v190, %v189
    %v194 = vpack.c.b16 %v192, %v191
    %197 = vst [vmem:[%s4] sm:$0xff] %v193
    %198 = vst [vmem:[%s4 + $0x8] sm:$0xff] %v194
  $region25: #{densebackproj_forward.26} parent=0 // pred_fallthru
    _
  // Predicated region
  $region26: #{densebackproj_forward.26} parent=0 // pred_check
    _
  $region27: #{densebackproj_forward.26} parent=0 // pred_check_branch
    %200 = sbr.rel (0) target = $region29
  $region28: #{densebackproj_forward.26} parent=0 // pred_region
    _
  $region29: #{densebackproj_forward.26} parent=0 // pred_fallthru
    _
  // Predicated region
  $region30: #{densebackproj_forward.26} parent=0 // pred_check
    _
  $region31: #{densebackproj_forward.26} parent=0 // pred_check_branch
    %202 = sbr.rel (0) target = $region33
  $region32: #{densebackproj_forward.26} parent=0 // pred_region
    _
  $region33: #{densebackproj_forward.26} parent=0 // pred_fallthru
    _

// kernel: densebackproj_forward.30
$region0: #{densebackproj_forward.30}
  #allocation0 [shape = 'u32[]', space=smem, size = 0x4, offset = 0x4, fixed_abs, tag = 'smem constant byte address 0x4 - core index']
  #allocation1 [shape = 'u32[144,128]{1,0:T(1,128)}', space=vmem, size = 0x12000, scoped, tag = 'internal scratch']
  #allocation2 [shape = 'f32[8,128]{1,0:T(8,128)}', space=vmem, size = 0x1000, scoped, tag = 'scratch operand']
  #allocation3 [shape = 'f32[1]{0:T(128)S(6)}', space=smem, size = 0x200, scoped, tag = 'scoped memory for densebackproj_forward.30']
  %s0 = inlined_call_operand.vmem [shape: bf16[8,16], index: 0, kind: input, shape index: {}]
  %s1 = inlined_call_operand.vmem [shape: bf16[16,128], index: 1, kind: input, shape index: {}]
  %s2 = inlined_call_operand.vmem [shape: f32[8,1], index: 2, kind: input, shape index: {}]
  %s3 = inlined_call_operand.<no memory space> [shape: f32[1], index: 3, kind: input, shape index: {}]
  %s4 = inlined_call_operand.vmem [shape: bf16[8,128], index: 4, kind: output, shape index: {}]
  %s5 = sld [smem:[#allocation0]]
  $region34: #{densebackproj_forward.30} parent=0
    _
  %s7 = ssub.s32 1, %s5
  %s8 = scalar_select 0, %s7, %s5
  %9 = sst [smem:[#allocation3]] %s3
  // Predicated region
  $region2: #{densebackproj_forward.30} parent=0 // pred_check
    _
  $region3: #{densebackproj_forward.30} parent=0 // pred_check_branch
    %11 = sbr.rel (0) target = $region5
  $region4: #{densebackproj_forward.30} parent=0 // pred_region
    _
  $region5: #{densebackproj_forward.30} parent=0 // pred_fallthru
    _
  // Predicated region
  $region6: #{densebackproj_forward.30} parent=0 // pred_check
    _
  $region7: #{densebackproj_forward.30} parent=0 // pred_check_branch
    %13 = sbr.rel (0) target = $region9
  $region8: #{densebackproj_forward.30} parent=0 // pred_region
    _
  $region9: #{densebackproj_forward.30} parent=0 // pred_fallthru
    _
  // Predicated region
  $region10: #{densebackproj_forward.30} parent=0 // pred_check
    _
  $region11: #{densebackproj_forward.30} parent=0 // pred_check_branch
    %15 = sbr.rel (0) target = $region13
  $region12: #{densebackproj_forward.30} parent=0 // pred_region
    _
  $region13: #{densebackproj_forward.30} parent=0 // pred_fallthru
    _
  // Predicated region
  $region14: #{densebackproj_forward.30} parent=0 // pred_check
    _
  $region15: #{densebackproj_forward.30} parent=0 // pred_check_branch
    %17 = sbr.rel (0) target = $region17
  $region16: #{densebackproj_forward.30} parent=0 // pred_region
    _
  $region17: #{densebackproj_forward.30} parent=0 // pred_fallthru
    _
  %p19 = scmp.eq.s32.totalorder 0, 0
  // Predicated region
  $region18: #{densebackproj_forward.30} parent=0 // pred_check
    %p20 = pneg %p19
  $region19: #{densebackproj_forward.30} parent=0 // pred_check_branch
    %22 = sbr.rel (%p20) target = $region21
  $region20: #{densebackproj_forward.30} parent=0 // pred_region
    %23 = vst [vmem:[#allocation2] sm:$0xff] 0.0
  $region21: #{densebackproj_forward.30} parent=0 // pred_fallthru
    _
  %v24 = vld [vmem:[#allocation2] sm:$0xff]
  %v25 = vld [vmem:[%s0] sm:$0xf]
  %v26 = vld [vmem:[%s1] sm:$0xf]
  %v27 = vld [vmem:[%s1 + $0x4] sm:$0xf]
  %v30 = vunpack.c.l.b16 %v26
  %v31 = vunpack.c.l.b16 %v27
  %v32 = vpack.c.b16 %v31, %v30
  %vm34 = vcmask 130048
  %v36 = vsel %vm34, %v25, 0
  %38 = vmatprep.subr.bf16.mxu0 0
  %39 = vmatpush1.bf16.msra.mxu0 %v32
  %40 = vmatprep.subr.bf16.mxu0 0
  %41 = vmatpush1.bf16.msra.mxu0 0
  %42 = vmatprep.subr.bf16.mxu0 0
  %43 = vmatpush1.bf16.msra.mxu0 0
  %44 = vmatprep.subr.bf16.mxu0 0
  %45 = vmatpush1.bf16.msra.mxu0 0
  %46 = vmatprep.subr.bf16.mxu0 0
  %47 = vmatpush1.bf16.msra.mxu0 0
  %48 = vmatprep.subr.bf16.mxu0 0
  %49 = vmatpush1.bf16.msra.mxu0 0
  %50 = vmatprep.subr.bf16.mxu0 0
  %51 = vmatpush1.bf16.msra.mxu0 0
  %52 = vmatprep.subr.bf16.mxu0 0
  %53 = vmatpush1.bf16.msra.mxu0 0
  %54 = vmatprep.subr.bf16.mxu0 0
  %55 = vmatpush1.bf16.msra.mxu0 0
  %56 = vmatprep.subr.bf16.mxu0 0
  %57 = vmatpush1.bf16.msra.mxu0 0
  %58 = vmatprep.subr.bf16.mxu0 0
  %59 = vmatpush1.bf16.msra.mxu0 0
  %60 = vmatprep.subr.bf16.mxu0 0
  %61 = vmatpush1.bf16.msra.mxu0 0
  %62 = vmatprep.subr.bf16.mxu0 0
  %63 = vmatpush1.bf16.msra.mxu0 0
  %64 = vmatprep.subr.bf16.mxu0 0
  %65 = vmatpush1.bf16.msra.mxu0 0
  %66 = vmatprep.subr.bf16.mxu0 0
  %67 = vmatpush1.bf16.msra.mxu0 0
  %68 = vmatprep.subr.bf16.mxu0 0
  %69 = vmatpush1.bf16.msra.mxu0 0
  %70 = vmatprep.mubr.bf16.mxu0 0
  %71 = vmatmul.mubr.bf16.gmra.mrb[0].mxu0 %v36
  %v72 = vpop.f32.mrb[0].mxu0
  %v73 = vadd.f32 0.0, %v72
  %v74 = vpop.f32.mrb[0].mxu0
  %v75 = vpop.f32.mrb[0].mxu0
  %v76 = vpop.f32.mrb[0].mxu0
  %77 = vdwg.mxu0
  %v78 = vadd.f32 %v24, %v73
  %79 = vst [vmem:[#allocation2] sm:$0xff] %v78
  // Predicated region
  $region22: #{densebackproj_forward.30} parent=0 // pred_check
    %p80 = pneg %p19
  $region23: #{densebackproj_forward.30} parent=0 // pred_check_branch
    %82 = sbr.rel (%p80) target = $region25
  $region24: #{densebackproj_forward.30} parent=0 // pred_region
    %v83 = vld [vmem:[#allocation2] sm:$0xff]
    %v84 = vld [vmem:[%s2] sm:$0xff]
    %86 = vset.pattern.permute.xlu0 0
    %87 = vperm.xlu0 %86, %v84
    %v88 = vpop.permute.xlu0 %87
    %v90 = vadd.f32 %v83, %v88
    %s91 = sld [smem:[#allocation3]]
    %vm92 = vcmp.ge.f32.partialorder %v90, 0.0
    %v93 = vstv %s91
    %v94 = vmul.f32 %v93, %v90
    %v95 = vsel %vm92, %v90, %v94
    %v96 = vpack.c.bf16 %v95, %v95
    %97 = vst [vmem:[%s4] sm:$0xf] %v96
  $region25: #{densebackproj_forward.30} parent=0 // pred_fallthru
    _
  // Predicated region
  $region26: #{densebackproj_forward.30} parent=0 // pred_check
    _
  $region27: #{densebackproj_forward.30} parent=0 // pred_check_branch
    %99 = sbr.rel (0) target = $region29
  $region28: #{densebackproj_forward.30} parent=0 // pred_region
    _
  $region29: #{densebackproj_forward.30} parent=0 // pred_fallthru
    _
  // Predicated region
  $region30: #{densebackproj_forward.30} parent=0 // pred_check
    _
  $region31: #{densebackproj_forward.30} parent=0 // pred_check_branch
    %101 = sbr.rel (0) target = $region33
  $region32: #{densebackproj_forward.30} parent=0 // pred_region
    _
  $region33: #{densebackproj_forward.30} parent=0 // pred_fallthru
    _

</llo_original>
